<compile_context>
chip_gen: v5e
topology: v5e:2x2
jax: 0.10.0
libtpu: 0.0.40
codegen_flags: <defaults>
</compile_context>

<pallas_src>
import numpy as np

import jax
import jax.numpy as jnp
from jax.experimental import pallas as pl
from jax.experimental.pallas import tpu as pltpu


BT = 8  # samples per grid step; must stay a multiple of 8 (one sublane tile) so the
        # leading-dim reshapes in the kernel are layout-trivial.


# ------------------------------- fused kernel -------------------------------

def _fused_mnist_kernel(x_ref,                      # (28, BT, 28)  image row, batch, W
                        a1e_ref, a1o_ref, b1_ref,   # conv1 banded weights / bias
                        a2e_ref, a2o_ref, b2_ref,   # conv2 banded weights / bias
                        w3_ref, b3_ref,             # fc1 (NCHW flatten folded in)
                        w4_ref, b4_ref,             # fc2
                        o_ref):                     # (BT, 10) log-probs
    f32 = jnp.float32
    bt = x_ref.shape[1]

    x = x_ref[...]                                   # (28, bt, 28)

    # ---- conv1 (5x5, 1 -> 10); W-direction of the 2x2 max-pool folded into the
    #      even/odd banded matrices A1e / A1o.  Rows are (ho, b). ------------------
    acc1e = None
    acc1o = None
    for i in range(5):
        xi = x[i:i + 24].reshape(24 * bt, 28)        # rows (ho, b): tile-trivial reshape
        te = jnp.dot(xi, a1e_ref[i], preferred_element_type=f32)
        to = jnp.dot(xi, a1o_ref[i], preferred_element_type=f32)
        acc1e = te if acc1e is None else acc1e + te
        acc1o = to if acc1o is None else acc1o + to
    b1 = b1_ref[...]
    y1 = jnp.maximum(acc1e + b1, acc1o + b1)         # (bt*24, 120), lanes = (wp, c)

    # H-direction of the pool + ReLU: rows (2*h1 + dh, b) are adjacent sublane
    # tiles, so the pool is a pure leading-dim reshape + elementwise max.
    y1 = y1.reshape(12, 2, bt, 120)
    p1 = jnp.maximum(jnp.maximum(y1[:, 0], y1[:, 1]), 0.0)   # (12, bt, 120)

    # ---- conv2 (5x5, 10 -> 20); Dropout2d is an identity at inference ------------
    acc2e = None
    acc2o = None
    for i in range(5):
        li = p1[i:i + 8].reshape(8 * bt, 120)        # rows (h2, b): leading-dim slice
        te = jnp.dot(li, a2e_ref[i], preferred_element_type=f32)
        to = jnp.dot(li, a2o_ref[i], preferred_element_type=f32)
        acc2e = te if acc2e is None else acc2e + te
        acc2o = to if acc2o is None else acc2o + to
    b2 = b2_ref[...]
    y2 = jnp.maximum(acc2e + b2, acc2o + b2)         # (bt*8, 80), lanes = (wp2, co)
    y2 = y2.reshape(4, 2, bt, 80)
    p2 = jnp.maximum(jnp.maximum(y2[:, 0], y2[:, 1]), 0.0)   # (4, bt, 80)

    # ---- flatten (PyTorch NCHW order folded into w3) + fc1 + ReLU -----------------
    h = None
    for r in range(4):                               # r = hp2
        t = jnp.dot(p2[r], w3_ref[r], preferred_element_type=f32)   # (bt, 50)
        h = t if h is None else h + t
    h = jnp.maximum(h + b3_ref[...], 0.0)
    # TODO(synk): Dropout2d / F.dropout are inference-time identities here; training-mode
    # stochastic dropout would use pltpu.prng_seed / pltpu.prng_random_bits.

    # ---- fc2 + log_softmax --------------------------------------------------------
    logits = jnp.dot(h, w4_ref[...], preferred_element_type=f32) + b4_ref[...]
    m = jnp.max(logits, axis=-1, keepdims=True)
    lse = jnp.log(jnp.sum(jnp.exp(logits - m), axis=-1, keepdims=True)) + m
    o_ref[...] = logits - lse


# --------------------------- host-side weight prep ---------------------------

def prepare_weights(params):
    """Turn torch-layout parameters into the banded matrices used by the fused
    kernel.  Done once, on the host, in numpy."""
    w1 = np.asarray(params["conv1_w"], np.float32)   # (10, 1, 5, 5)
    b1 = np.asarray(params["conv1_b"], np.float32)   # (10,)
    w2 = np.asarray(params["conv2_w"], np.float32)   # (20, 10, 5, 5)
    b2 = np.asarray(params["conv2_b"], np.float32)   # (20,)
    fc1_w = np.asarray(params["fc1_w"], np.float32)  # (50, 320)  torch (out, in)
    fc1_b = np.asarray(params["fc1_b"], np.float32)  # (50,)
    fc2_w = np.asarray(params["fc2_w"], np.float32)  # (10, 50)
    fc2_b = np.asarray(params["fc2_b"], np.float32)  # (10,)

    C1, C2 = 10, 20

    # conv1 banded weights: output lanes (wp*10 + c), wp = pooled W index.
    a1e = np.zeros((5, 28, 12 * C1), np.float32)     # even output columns (wo = 2*wp)
    a1o = np.zeros((5, 28, 12 * C1), np.float32)     # odd  output columns (wo = 2*wp+1)
    for i in range(5):
        for wp in range(12):
            for j in range(5):
                a1e[i, 2 * wp + j,     wp * C1:(wp + 1) * C1] = w1[:, 0, i, j]
                a1o[i, 2 * wp + 1 + j, wp * C1:(wp + 1) * C1] = w1[:, 0, i, j]
    b1row = np.tile(b1, 12)[None, :]                 # (1, 120)

    # conv2 banded weights: input lanes (w1*10 + ci), output lanes (wp2*20 + co).
    a2e = np.zeros((5, 12 * C1, 4 * C2), np.float32)
    a2o = np.zeros((5, 12 * C1, 4 * C2), np.float32)
    for i in range(5):
        for wp2 in range(4):
            for j in range(5):
                blk = w2[:, :, i, j].T               # (ci, co)
                a2e[i, (2 * wp2 + j) * C1:(2 * wp2 + j + 1) * C1,
                    wp2 * C2:(wp2 + 1) * C2] = blk
                a2o[i, (2 * wp2 + 1 + j) * C1:(2 * wp2 + 2 + j) * C1,
                    wp2 * C2:(wp2 + 1) * C2] = blk
    b2row = np.tile(b2, 4)[None, :]                  # (1, 80)

    # fc1 with the PyTorch NCHW flatten (index = co*16 + hp2*4 + wp2) folded in.
    w3 = np.zeros((4, 4 * C2, 50), np.float32)
    for r in range(4):                               # r = hp2
        for wp2 in range(4):
            for co in range(C2):
                w3[r, wp2 * C2 + co, :] = fc1_w[:, co * 16 + r * 4 + wp2]
    b3row = fc1_b[None, :]                           # (1, 50)

    w4 = fc2_w.T.copy()                              # (50, 10)
    b4row = fc2_b[None, :]                           # (1, 10)

    arrays = (a1e, a1o, b1row, a2e, a2o, b2row, w3, b3row, w4, b4row)
    return [jnp.asarray(a) for a in arrays]


# --------------------------------- wrapper -----------------------------------

def mnist_forward(x_nchw, weights):
    """x_nchw: (B, 1, 28, 28) float32; weights: output of prepare_weights()."""
    B = x_nchw.shape[0]
    x = x_nchw.reshape(B, 28, 28).astype(jnp.float32)
    bpad = -(-B // BT) * BT
    if bpad != B:
        x = jnp.pad(x, ((0, bpad - B), (0, 0), (0, 0)))
    # Layout plumbing only: image rows become the leading axis so in-kernel row
    # windows / pooling are leading-dim slices of whole sublane tiles.
    xt = jnp.transpose(x, (1, 0, 2))                 # (28, bpad, 28)

    def _full(shape):
        n = len(shape)
        return pl.BlockSpec(shape, lambda i, _n=n: (0,) * _n)

    in_specs = [pl.BlockSpec((28, BT, 28), lambda i: (0, i, 0))]
    in_specs += [_full(tuple(w.shape)) for w in weights]

    out = pl.pallas_call(
        _fused_mnist_kernel,
        out_shape=jax.ShapeDtypeStruct((bpad, 10), jnp.float32),
        grid_spec=pltpu.PrefetchScalarGridSpec(
            num_scalar_prefetch=0,
            grid=(bpad // BT,),
            in_specs=in_specs,
            out_specs=pl.BlockSpec((BT, 10), lambda i: (i, 0)),
        ),
        compiler_params=pltpu.CompilerParams(
            dimension_semantics=("parallel",),
            vmem_limit_bytes=32 * 1024 * 1024,
        ),
    )(xt, *weights)
    return out[:B]


# ------------------------- pure-JAX reference (torch semantics) --------------

def reference_forward(x_nchw, params):
    hp = jax.lax.Precision.HIGHEST
    dn = ("NCHW", "OIHW", "NCHW")
    x = x_nchw.astype(jnp.float32)
    y = jax.lax.conv_general_dilated(x, params["conv1_w"], (1, 1), "VALID",
                                     dimension_numbers=dn, precision=hp)
    y = y + params["conv1_b"].reshape(1, -1, 1, 1)
    y = jax.lax.reduce_window(y, -jnp.inf, jax.lax.max,
                              (1, 1, 2, 2), (1, 1, 2, 2), "VALID")
    y = jnp.maximum(y, 0.0)
    y = jax.lax.conv_general_dilated(y, params["conv2_w"], (1, 1), "VALID",
                                     dimension_numbers=dn, precision=hp)
    y = y + params["conv2_b"].reshape(1, -1, 1, 1)
    y = jax.lax.reduce_window(y, -jnp.inf, jax.lax.max,
                              (1, 1, 2, 2), (1, 1, 2, 2), "VALID")
    y = jnp.maximum(y, 0.0)
    flat = y.reshape(y.shape[0], -1)                 # NCHW flatten == torch .view(-1, 320)
    h = jnp.maximum(jnp.dot(flat, params["fc1_w"].T, precision=hp)
                    + params["fc1_b"], 0.0)
    logits = jnp.dot(h, params["fc2_w"].T, precision=hp) + params["fc2_b"]
    return jax.nn.log_softmax(logits, axis=1)


# ----------------------------------- main -------------------------------------

if __name__ == "__main__":
    key = jax.random.PRNGKey(0)
    ks = jax.random.split(key, 9)

    # Deterministic synthetic parameters in the PyTorch layouts of MNISTModel.
    params = {
        "conv1_w": 0.1 * jax.random.normal(ks[0], (10, 1, 5, 5), jnp.float32),
        "conv1_b": 0.1 * jax.random.normal(ks[1], (10,), jnp.float32),
        "conv2_w": 0.1 * jax.random.normal(ks[2], (20, 10, 5, 5), jnp.float32),
        "conv2_b": 0.1 * jax.random.normal(ks[3], (20,), jnp.float32),
        "fc1_w": 0.05 * jax.random.normal(ks[4], (50, 320), jnp.float32),
        "fc1_b": 0.05 * jax.random.normal(ks[5], (50,), jnp.float32),
        "fc2_w": 0.1 * jax.random.normal(ks[6], (10, 50), jnp.float32),
        "fc2_b": 0.1 * jax.random.normal(ks[7], (10,), jnp.float32),
    }

    # MNIST-shaped input (28x28 is required so the flatten yields 320 features).
    x = jax.random.normal(ks[8], (2, 1, 28, 28), jnp.float32)

    weights = prepare_weights(params)

    out = jax.block_until_ready(mnist_forward(x, weights))
    ref = jax.block_until_ready(reference_forward(x, params))

    assert out.shape == (2, 10)
    assert jnp.allclose(out, ref, rtol=1e-3, atol=1e-4), "mismatch vs reference"

    print("KERNEL_OK")
</pallas_src>

<mosaic_0001>
module attributes {stable_mosaic.version = 11 : i64} {
  func.func @_fused_mnist_kernel(%arg0: i32, %arg1: memref<28x8x28xf32, #tpu.memory_space<vmem>>, %arg2: memref<5x28x120xf32, #tpu.memory_space<vmem>>, %arg3: memref<5x28x120xf32, #tpu.memory_space<vmem>>, %arg4: memref<1x120xf32, #tpu.memory_space<vmem>>, %arg5: memref<5x120x80xf32, #tpu.memory_space<vmem>>, %arg6: memref<5x120x80xf32, #tpu.memory_space<vmem>>, %arg7: memref<1x80xf32, #tpu.memory_space<vmem>>, %arg8: memref<4x80x50xf32, #tpu.memory_space<vmem>>, %arg9: memref<1x50xf32, #tpu.memory_space<vmem>>, %arg10: memref<50x10xf32, #tpu.memory_space<vmem>>, %arg11: memref<1x10xf32, #tpu.memory_space<vmem>>, %arg12: memref<8x10xf32, #tpu.memory_space<vmem>>) attributes {dimension_semantics = [#tpu.dimension_semantics<parallel>], iteration_bounds = array<i64: 1>, scalar_prefetch = 0 : i64, scratch_operands = 0 : i64, tpu.core_type = #tpu.core_type<tc>, window_params = [{transform_indices = @transform_0, window_bounds = array<i64: 28, 8, 28>}, {pipeline_mode = #tpu.pipeline_mode<synchronous>, transform_indices = @transform_1, window_bounds = array<i64: 5, 28, 120>}, {pipeline_mode = #tpu.pipeline_mode<synchronous>, transform_indices = @transform_2, window_bounds = array<i64: 5, 28, 120>}, {pipeline_mode = #tpu.pipeline_mode<synchronous>, transform_indices = @transform_3, window_bounds = array<i64: 1, 120>}, {pipeline_mode = #tpu.pipeline_mode<synchronous>, transform_indices = @transform_4, window_bounds = array<i64: 5, 120, 80>}, {pipeline_mode = #tpu.pipeline_mode<synchronous>, transform_indices = @transform_5, window_bounds = array<i64: 5, 120, 80>}, {pipeline_mode = #tpu.pipeline_mode<synchronous>, transform_indices = @transform_6, window_bounds = array<i64: 1, 80>}, {pipeline_mode = #tpu.pipeline_mode<synchronous>, transform_indices = @transform_7, window_bounds = array<i64: 4, 80, 50>}, {pipeline_mode = #tpu.pipeline_mode<synchronous>, transform_indices = @transform_8, window_bounds = array<i64: 1, 50>}, {pipeline_mode = #tpu.pipeline_mode<synchronous>, transform_indices = @transform_9, window_bounds = array<i64: 50, 10>}, {pipeline_mode = #tpu.pipeline_mode<synchronous>, transform_indices = @transform_10, window_bounds = array<i64: 1, 10>}, {transform_indices = @transform_11, window_bounds = array<i64: 8, 10>}]} {
    %c0 = arith.constant 0 : index
    %c0_0 = arith.constant 0 : index
    %c0_1 = arith.constant 0 : index
    %0 = vector.load %arg1[%c0, %c0_0, %c0_1] : memref<28x8x28xf32, #tpu.memory_space<vmem>>, vector<28x8x28xf32>
    %1 = vector.extract_strided_slice %0 {offsets = [0, 0, 0], sizes = [24, 8, 28], strides = [1, 1, 1]} : vector<28x8x28xf32> to vector<24x8x28xf32>
    %2 = vector.shape_cast %1 : vector<24x8x28xf32> to vector<192x28xf32>
    %c0_2 = arith.constant 0 : index
    %c0_3 = arith.constant 0 : index
    %c0_4 = arith.constant 0 : index
    %3 = vector.load %arg2[%c0_2, %c0_3, %c0_4] : memref<5x28x120xf32, #tpu.memory_space<vmem>>, vector<1x28x120xf32>
    %4 = vector.shape_cast %3 : vector<1x28x120xf32> to vector<28x120xf32>
    %cst = arith.constant dense<0.000000e+00> : vector<192x120xf32>
    %5 = tpu.matmul %2, %4, %cst {dimension_numbers = #tpu.dot_dimension_numbers<[1], [0], [0], [1], [0, 0, 1, 1], [], []>} : vector<192x28xf32>, vector<28x120xf32>, vector<192x120xf32> -> vector<192x120xf32>
    %c0_5 = arith.constant 0 : index
    %c0_6 = arith.constant 0 : index
    %c0_7 = arith.constant 0 : index
    %6 = vector.load %arg3[%c0_5, %c0_6, %c0_7] : memref<5x28x120xf32, #tpu.memory_space<vmem>>, vector<1x28x120xf32>
    %7 = vector.shape_cast %6 : vector<1x28x120xf32> to vector<28x120xf32>
    %cst_8 = arith.constant dense<0.000000e+00> : vector<192x120xf32>
    %8 = tpu.matmul %2, %7, %cst_8 {dimension_numbers = #tpu.dot_dimension_numbers<[1], [0], [0], [1], [0, 0, 1, 1], [], []>} : vector<192x28xf32>, vector<28x120xf32>, vector<192x120xf32> -> vector<192x120xf32>
    %9 = vector.extract_strided_slice %0 {offsets = [1, 0, 0], sizes = [24, 8, 28], strides = [1, 1, 1]} : vector<28x8x28xf32> to vector<24x8x28xf32>
    %10 = vector.shape_cast %9 : vector<24x8x28xf32> to vector<192x28xf32>
    %c1 = arith.constant 1 : index
    %c0_9 = arith.constant 0 : index
    %c0_10 = arith.constant 0 : index
    %11 = vector.load %arg2[%c1, %c0_9, %c0_10] : memref<5x28x120xf32, #tpu.memory_space<vmem>>, vector<1x28x120xf32>
    %12 = vector.shape_cast %11 : vector<1x28x120xf32> to vector<28x120xf32>
    %cst_11 = arith.constant dense<0.000000e+00> : vector<192x120xf32>
    %13 = tpu.matmul %10, %12, %cst_11 {dimension_numbers = #tpu.dot_dimension_numbers<[1], [0], [0], [1], [0, 0, 1, 1], [], []>} : vector<192x28xf32>, vector<28x120xf32>, vector<192x120xf32> -> vector<192x120xf32>
    %c1_12 = arith.constant 1 : index
    %c0_13 = arith.constant 0 : index
    %c0_14 = arith.constant 0 : index
    %14 = vector.load %arg3[%c1_12, %c0_13, %c0_14] : memref<5x28x120xf32, #tpu.memory_space<vmem>>, vector<1x28x120xf32>
    %15 = vector.shape_cast %14 : vector<1x28x120xf32> to vector<28x120xf32>
    %cst_15 = arith.constant dense<0.000000e+00> : vector<192x120xf32>
    %16 = tpu.matmul %10, %15, %cst_15 {dimension_numbers = #tpu.dot_dimension_numbers<[1], [0], [0], [1], [0, 0, 1, 1], [], []>} : vector<192x28xf32>, vector<28x120xf32>, vector<192x120xf32> -> vector<192x120xf32>
    %17 = arith.addf %5, %13 : vector<192x120xf32>
    %18 = arith.addf %8, %16 : vector<192x120xf32>
    %19 = vector.extract_strided_slice %0 {offsets = [2, 0, 0], sizes = [24, 8, 28], strides = [1, 1, 1]} : vector<28x8x28xf32> to vector<24x8x28xf32>
    %20 = vector.shape_cast %19 : vector<24x8x28xf32> to vector<192x28xf32>
    %c2 = arith.constant 2 : index
    %c0_16 = arith.constant 0 : index
    %c0_17 = arith.constant 0 : index
    %21 = vector.load %arg2[%c2, %c0_16, %c0_17] : memref<5x28x120xf32, #tpu.memory_space<vmem>>, vector<1x28x120xf32>
    %22 = vector.shape_cast %21 : vector<1x28x120xf32> to vector<28x120xf32>
    %cst_18 = arith.constant dense<0.000000e+00> : vector<192x120xf32>
    %23 = tpu.matmul %20, %22, %cst_18 {dimension_numbers = #tpu.dot_dimension_numbers<[1], [0], [0], [1], [0, 0, 1, 1], [], []>} : vector<192x28xf32>, vector<28x120xf32>, vector<192x120xf32> -> vector<192x120xf32>
    %c2_19 = arith.constant 2 : index
    %c0_20 = arith.constant 0 : index
    %c0_21 = arith.constant 0 : index
    %24 = vector.load %arg3[%c2_19, %c0_20, %c0_21] : memref<5x28x120xf32, #tpu.memory_space<vmem>>, vector<1x28x120xf32>
    %25 = vector.shape_cast %24 : vector<1x28x120xf32> to vector<28x120xf32>
    %cst_22 = arith.constant dense<0.000000e+00> : vector<192x120xf32>
    %26 = tpu.matmul %20, %25, %cst_22 {dimension_numbers = #tpu.dot_dimension_numbers<[1], [0], [0], [1], [0, 0, 1, 1], [], []>} : vector<192x28xf32>, vector<28x120xf32>, vector<192x120xf32> -> vector<192x120xf32>
    %27 = arith.addf %17, %23 : vector<192x120xf32>
    %28 = arith.addf %18, %26 : vector<192x120xf32>
    %29 = vector.extract_strided_slice %0 {offsets = [3, 0, 0], sizes = [24, 8, 28], strides = [1, 1, 1]} : vector<28x8x28xf32> to vector<24x8x28xf32>
    %30 = vector.shape_cast %29 : vector<24x8x28xf32> to vector<192x28xf32>
    %c3 = arith.constant 3 : index
    %c0_23 = arith.constant 0 : index
    %c0_24 = arith.constant 0 : index
    %31 = vector.load %arg2[%c3, %c0_23, %c0_24] : memref<5x28x120xf32, #tpu.memory_space<vmem>>, vector<1x28x120xf32>
    %32 = vector.shape_cast %31 : vector<1x28x120xf32> to vector<28x120xf32>
    %cst_25 = arith.constant dense<0.000000e+00> : vector<192x120xf32>
    %33 = tpu.matmul %30, %32, %cst_25 {dimension_numbers = #tpu.dot_dimension_numbers<[1], [0], [0], [1], [0, 0, 1, 1], [], []>} : vector<192x28xf32>, vector<28x120xf32>, vector<192x120xf32> -> vector<192x120xf32>
    %c3_26 = arith.constant 3 : index
    %c0_27 = arith.constant 0 : index
    %c0_28 = arith.constant 0 : index
    %34 = vector.load %arg3[%c3_26, %c0_27, %c0_28] : memref<5x28x120xf32, #tpu.memory_space<vmem>>, vector<1x28x120xf32>
    %35 = vector.shape_cast %34 : vector<1x28x120xf32> to vector<28x120xf32>
    %cst_29 = arith.constant dense<0.000000e+00> : vector<192x120xf32>
    %36 = tpu.matmul %30, %35, %cst_29 {dimension_numbers = #tpu.dot_dimension_numbers<[1], [0], [0], [1], [0, 0, 1, 1], [], []>} : vector<192x28xf32>, vector<28x120xf32>, vector<192x120xf32> -> vector<192x120xf32>
    %37 = arith.addf %27, %33 : vector<192x120xf32>
    %38 = arith.addf %28, %36 : vector<192x120xf32>
    %39 = vector.extract_strided_slice %0 {offsets = [4, 0, 0], sizes = [24, 8, 28], strides = [1, 1, 1]} : vector<28x8x28xf32> to vector<24x8x28xf32>
    %40 = vector.shape_cast %39 : vector<24x8x28xf32> to vector<192x28xf32>
    %c4 = arith.constant 4 : index
    %c0_30 = arith.constant 0 : index
    %c0_31 = arith.constant 0 : index
    %41 = vector.load %arg2[%c4, %c0_30, %c0_31] : memref<5x28x120xf32, #tpu.memory_space<vmem>>, vector<1x28x120xf32>
    %42 = vector.shape_cast %41 : vector<1x28x120xf32> to vector<28x120xf32>
    %cst_32 = arith.constant dense<0.000000e+00> : vector<192x120xf32>
    %43 = tpu.matmul %40, %42, %cst_32 {dimension_numbers = #tpu.dot_dimension_numbers<[1], [0], [0], [1], [0, 0, 1, 1], [], []>} : vector<192x28xf32>, vector<28x120xf32>, vector<192x120xf32> -> vector<192x120xf32>
    %c4_33 = arith.constant 4 : index
    %c0_34 = arith.constant 0 : index
    %c0_35 = arith.constant 0 : index
    %44 = vector.load %arg3[%c4_33, %c0_34, %c0_35] : memref<5x28x120xf32, #tpu.memory_space<vmem>>, vector<1x28x120xf32>
    %45 = vector.shape_cast %44 : vector<1x28x120xf32> to vector<28x120xf32>
    %cst_36 = arith.constant dense<0.000000e+00> : vector<192x120xf32>
    %46 = tpu.matmul %40, %45, %cst_36 {dimension_numbers = #tpu.dot_dimension_numbers<[1], [0], [0], [1], [0, 0, 1, 1], [], []>} : vector<192x28xf32>, vector<28x120xf32>, vector<192x120xf32> -> vector<192x120xf32>
    %47 = arith.addf %37, %43 : vector<192x120xf32>
    %48 = arith.addf %38, %46 : vector<192x120xf32>
    %c0_37 = arith.constant 0 : index
    %c0_38 = arith.constant 0 : index
    %49 = vector.load %arg4[%c0_37, %c0_38] : memref<1x120xf32, #tpu.memory_space<vmem>>, vector<1x120xf32>
    %50 = vector.broadcast %49 : vector<1x120xf32> to vector<192x120xf32>
    %51 = arith.addf %47, %50 : vector<192x120xf32>
    %52 = vector.broadcast %49 : vector<1x120xf32> to vector<192x120xf32>
    %53 = arith.addf %48, %52 : vector<192x120xf32>
    %54 = arith.maximumf %51, %53 : vector<192x120xf32>
    %55 = vector.shape_cast %54 : vector<192x120xf32> to vector<12x2x8x120xf32>
    %56 = vector.extract_strided_slice %55 {offsets = [0, 0, 0, 0], sizes = [12, 1, 8, 120], strides = [1, 1, 1, 1]} : vector<12x2x8x120xf32> to vector<12x1x8x120xf32>
    %57 = vector.shape_cast %56 : vector<12x1x8x120xf32> to vector<12x8x120xf32>
    %58 = vector.extract_strided_slice %55 {offsets = [0, 1, 0, 0], sizes = [12, 1, 8, 120], strides = [1, 1, 1, 1]} : vector<12x2x8x120xf32> to vector<12x1x8x120xf32>
    %59 = vector.shape_cast %58 : vector<12x1x8x120xf32> to vector<12x8x120xf32>
    %60 = arith.maximumf %57, %59 : vector<12x8x120xf32>
    %cst_39 = arith.constant 0.000000e+00 : f32
    %61 = vector.broadcast %cst_39 : f32 to vector<12x8x120xf32>
    %62 = arith.maximumf %60, %61 : vector<12x8x120xf32>
    %63 = vector.extract_strided_slice %62 {offsets = [0, 0, 0], sizes = [8, 8, 120], strides = [1, 1, 1]} : vector<12x8x120xf32> to vector<8x8x120xf32>
    %64 = vector.shape_cast %63 : vector<8x8x120xf32> to vector<64x120xf32>
    %c0_40 = arith.constant 0 : index
    %c0_41 = arith.constant 0 : index
    %c0_42 = arith.constant 0 : index
    %65 = vector.load %arg5[%c0_40, %c0_41, %c0_42] : memref<5x120x80xf32, #tpu.memory_space<vmem>>, vector<1x120x80xf32>
    %66 = vector.shape_cast %65 : vector<1x120x80xf32> to vector<120x80xf32>
    %cst_43 = arith.constant dense<0.000000e+00> : vector<64x80xf32>
    %67 = tpu.matmul %64, %66, %cst_43 {dimension_numbers = #tpu.dot_dimension_numbers<[1], [0], [0], [1], [0, 0, 1, 1], [], []>} : vector<64x120xf32>, vector<120x80xf32>, vector<64x80xf32> -> vector<64x80xf32>
    %c0_44 = arith.constant 0 : index
    %c0_45 = arith.constant 0 : index
    %c0_46 = arith.constant 0 : index
    %68 = vector.load %arg6[%c0_44, %c0_45, %c0_46] : memref<5x120x80xf32, #tpu.memory_space<vmem>>, vector<1x120x80xf32>
    %69 = vector.shape_cast %68 : vector<1x120x80xf32> to vector<120x80xf32>
    %cst_47 = arith.constant dense<0.000000e+00> : vector<64x80xf32>
    %70 = tpu.matmul %64, %69, %cst_47 {dimension_numbers = #tpu.dot_dimension_numbers<[1], [0], [0], [1], [0, 0, 1, 1], [], []>} : vector<64x120xf32>, vector<120x80xf32>, vector<64x80xf32> -> vector<64x80xf32>
    %71 = vector.extract_strided_slice %62 {offsets = [1, 0, 0], sizes = [8, 8, 120], strides = [1, 1, 1]} : vector<12x8x120xf32> to vector<8x8x120xf32>
    %72 = vector.shape_cast %71 : vector<8x8x120xf32> to vector<64x120xf32>
    %c1_48 = arith.constant 1 : index
    %c0_49 = arith.constant 0 : index
    %c0_50 = arith.constant 0 : index
    %73 = vector.load %arg5[%c1_48, %c0_49, %c0_50] : memref<5x120x80xf32, #tpu.memory_space<vmem>>, vector<1x120x80xf32>
    %74 = vector.shape_cast %73 : vector<1x120x80xf32> to vector<120x80xf32>
    %cst_51 = arith.constant dense<0.000000e+00> : vector<64x80xf32>
    %75 = tpu.matmul %72, %74, %cst_51 {dimension_numbers = #tpu.dot_dimension_numbers<[1], [0], [0], [1], [0, 0, 1, 1], [], []>} : vector<64x120xf32>, vector<120x80xf32>, vector<64x80xf32> -> vector<64x80xf32>
    %c1_52 = arith.constant 1 : index
    %c0_53 = arith.constant 0 : index
    %c0_54 = arith.constant 0 : index
    %76 = vector.load %arg6[%c1_52, %c0_53, %c0_54] : memref<5x120x80xf32, #tpu.memory_space<vmem>>, vector<1x120x80xf32>
    %77 = vector.shape_cast %76 : vector<1x120x80xf32> to vector<120x80xf32>
    %cst_55 = arith.constant dense<0.000000e+00> : vector<64x80xf32>
    %78 = tpu.matmul %72, %77, %cst_55 {dimension_numbers = #tpu.dot_dimension_numbers<[1], [0], [0], [1], [0, 0, 1, 1], [], []>} : vector<64x120xf32>, vector<120x80xf32>, vector<64x80xf32> -> vector<64x80xf32>
    %79 = arith.addf %67, %75 : vector<64x80xf32>
    %80 = arith.addf %70, %78 : vector<64x80xf32>
    %81 = vector.extract_strided_slice %62 {offsets = [2, 0, 0], sizes = [8, 8, 120], strides = [1, 1, 1]} : vector<12x8x120xf32> to vector<8x8x120xf32>
    %82 = vector.shape_cast %81 : vector<8x8x120xf32> to vector<64x120xf32>
    %c2_56 = arith.constant 2 : index
    %c0_57 = arith.constant 0 : index
    %c0_58 = arith.constant 0 : index
    %83 = vector.load %arg5[%c2_56, %c0_57, %c0_58] : memref<5x120x80xf32, #tpu.memory_space<vmem>>, vector<1x120x80xf32>
    %84 = vector.shape_cast %83 : vector<1x120x80xf32> to vector<120x80xf32>
    %cst_59 = arith.constant dense<0.000000e+00> : vector<64x80xf32>
    %85 = tpu.matmul %82, %84, %cst_59 {dimension_numbers = #tpu.dot_dimension_numbers<[1], [0], [0], [1], [0, 0, 1, 1], [], []>} : vector<64x120xf32>, vector<120x80xf32>, vector<64x80xf32> -> vector<64x80xf32>
    %c2_60 = arith.constant 2 : index
    %c0_61 = arith.constant 0 : index
    %c0_62 = arith.constant 0 : index
    %86 = vector.load %arg6[%c2_60, %c0_61, %c0_62] : memref<5x120x80xf32, #tpu.memory_space<vmem>>, vector<1x120x80xf32>
    %87 = vector.shape_cast %86 : vector<1x120x80xf32> to vector<120x80xf32>
    %cst_63 = arith.constant dense<0.000000e+00> : vector<64x80xf32>
    %88 = tpu.matmul %82, %87, %cst_63 {dimension_numbers = #tpu.dot_dimension_numbers<[1], [0], [0], [1], [0, 0, 1, 1], [], []>} : vector<64x120xf32>, vector<120x80xf32>, vector<64x80xf32> -> vector<64x80xf32>
    %89 = arith.addf %79, %85 : vector<64x80xf32>
    %90 = arith.addf %80, %88 : vector<64x80xf32>
    %91 = vector.extract_strided_slice %62 {offsets = [3, 0, 0], sizes = [8, 8, 120], strides = [1, 1, 1]} : vector<12x8x120xf32> to vector<8x8x120xf32>
    %92 = vector.shape_cast %91 : vector<8x8x120xf32> to vector<64x120xf32>
    %c3_64 = arith.constant 3 : index
    %c0_65 = arith.constant 0 : index
    %c0_66 = arith.constant 0 : index
    %93 = vector.load %arg5[%c3_64, %c0_65, %c0_66] : memref<5x120x80xf32, #tpu.memory_space<vmem>>, vector<1x120x80xf32>
    %94 = vector.shape_cast %93 : vector<1x120x80xf32> to vector<120x80xf32>
    %cst_67 = arith.constant dense<0.000000e+00> : vector<64x80xf32>
    %95 = tpu.matmul %92, %94, %cst_67 {dimension_numbers = #tpu.dot_dimension_numbers<[1], [0], [0], [1], [0, 0, 1, 1], [], []>} : vector<64x120xf32>, vector<120x80xf32>, vector<64x80xf32> -> vector<64x80xf32>
    %c3_68 = arith.constant 3 : index
    %c0_69 = arith.constant 0 : index
    %c0_70 = arith.constant 0 : index
    %96 = vector.load %arg6[%c3_68, %c0_69, %c0_70] : memref<5x120x80xf32, #tpu.memory_space<vmem>>, vector<1x120x80xf32>
    %97 = vector.shape_cast %96 : vector<1x120x80xf32> to vector<120x80xf32>
    %cst_71 = arith.constant dense<0.000000e+00> : vector<64x80xf32>
    %98 = tpu.matmul %92, %97, %cst_71 {dimension_numbers = #tpu.dot_dimension_numbers<[1], [0], [0], [1], [0, 0, 1, 1], [], []>} : vector<64x120xf32>, vector<120x80xf32>, vector<64x80xf32> -> vector<64x80xf32>
    %99 = arith.addf %89, %95 : vector<64x80xf32>
    %100 = arith.addf %90, %98 : vector<64x80xf32>
    %101 = vector.extract_strided_slice %62 {offsets = [4, 0, 0], sizes = [8, 8, 120], strides = [1, 1, 1]} : vector<12x8x120xf32> to vector<8x8x120xf32>
    %102 = vector.shape_cast %101 : vector<8x8x120xf32> to vector<64x120xf32>
    %c4_72 = arith.constant 4 : index
    %c0_73 = arith.constant 0 : index
    %c0_74 = arith.constant 0 : index
    %103 = vector.load %arg5[%c4_72, %c0_73, %c0_74] : memref<5x120x80xf32, #tpu.memory_space<vmem>>, vector<1x120x80xf32>
    %104 = vector.shape_cast %103 : vector<1x120x80xf32> to vector<120x80xf32>
    %cst_75 = arith.constant dense<0.000000e+00> : vector<64x80xf32>
    %105 = tpu.matmul %102, %104, %cst_75 {dimension_numbers = #tpu.dot_dimension_numbers<[1], [0], [0], [1], [0, 0, 1, 1], [], []>} : vector<64x120xf32>, vector<120x80xf32>, vector<64x80xf32> -> vector<64x80xf32>
    %c4_76 = arith.constant 4 : index
    %c0_77 = arith.constant 0 : index
    %c0_78 = arith.constant 0 : index
    %106 = vector.load %arg6[%c4_76, %c0_77, %c0_78] : memref<5x120x80xf32, #tpu.memory_space<vmem>>, vector<1x120x80xf32>
    %107 = vector.shape_cast %106 : vector<1x120x80xf32> to vector<120x80xf32>
    %cst_79 = arith.constant dense<0.000000e+00> : vector<64x80xf32>
    %108 = tpu.matmul %102, %107, %cst_79 {dimension_numbers = #tpu.dot_dimension_numbers<[1], [0], [0], [1], [0, 0, 1, 1], [], []>} : vector<64x120xf32>, vector<120x80xf32>, vector<64x80xf32> -> vector<64x80xf32>
    %109 = arith.addf %99, %105 : vector<64x80xf32>
    %110 = arith.addf %100, %108 : vector<64x80xf32>
    %c0_80 = arith.constant 0 : index
    %c0_81 = arith.constant 0 : index
    %111 = vector.load %arg7[%c0_80, %c0_81] : memref<1x80xf32, #tpu.memory_space<vmem>>, vector<1x80xf32>
    %112 = vector.broadcast %111 : vector<1x80xf32> to vector<64x80xf32>
    %113 = arith.addf %109, %112 : vector<64x80xf32>
    %114 = vector.broadcast %111 : vector<1x80xf32> to vector<64x80xf32>
    %115 = arith.addf %110, %114 : vector<64x80xf32>
    %116 = arith.maximumf %113, %115 : vector<64x80xf32>
    %117 = vector.shape_cast %116 : vector<64x80xf32> to vector<4x2x8x80xf32>
    %118 = vector.extract_strided_slice %117 {offsets = [0, 0, 0, 0], sizes = [4, 1, 8, 80], strides = [1, 1, 1, 1]} : vector<4x2x8x80xf32> to vector<4x1x8x80xf32>
    %119 = vector.shape_cast %118 : vector<4x1x8x80xf32> to vector<4x8x80xf32>
    %120 = vector.extract_strided_slice %117 {offsets = [0, 1, 0, 0], sizes = [4, 1, 8, 80], strides = [1, 1, 1, 1]} : vector<4x2x8x80xf32> to vector<4x1x8x80xf32>
    %121 = vector.shape_cast %120 : vector<4x1x8x80xf32> to vector<4x8x80xf32>
    %122 = arith.maximumf %119, %121 : vector<4x8x80xf32>
    %cst_82 = arith.constant 0.000000e+00 : f32
    %123 = vector.broadcast %cst_82 : f32 to vector<4x8x80xf32>
    %124 = arith.maximumf %122, %123 : vector<4x8x80xf32>
    %125 = vector.extract_strided_slice %124 {offsets = [0, 0, 0], sizes = [1, 8, 80], strides = [1, 1, 1]} : vector<4x8x80xf32> to vector<1x8x80xf32>
    %126 = vector.shape_cast %125 : vector<1x8x80xf32> to vector<8x80xf32>
    %c0_83 = arith.constant 0 : index
    %c0_84 = arith.constant 0 : index
    %c0_85 = arith.constant 0 : index
    %127 = vector.load %arg8[%c0_83, %c0_84, %c0_85] : memref<4x80x50xf32, #tpu.memory_space<vmem>>, vector<1x80x50xf32>
    %128 = vector.shape_cast %127 : vector<1x80x50xf32> to vector<80x50xf32>
    %cst_86 = arith.constant dense<0.000000e+00> : vector<8x50xf32>
    %129 = tpu.matmul %126, %128, %cst_86 {dimension_numbers = #tpu.dot_dimension_numbers<[1], [0], [0], [1], [0, 0, 1, 1], [], []>} : vector<8x80xf32>, vector<80x50xf32>, vector<8x50xf32> -> vector<8x50xf32>
    %130 = vector.extract_strided_slice %124 {offsets = [1, 0, 0], sizes = [1, 8, 80], strides = [1, 1, 1]} : vector<4x8x80xf32> to vector<1x8x80xf32>
    %131 = vector.shape_cast %130 : vector<1x8x80xf32> to vector<8x80xf32>
    %c1_87 = arith.constant 1 : index
    %c0_88 = arith.constant 0 : index
    %c0_89 = arith.constant 0 : index
    %132 = vector.load %arg8[%c1_87, %c0_88, %c0_89] : memref<4x80x50xf32, #tpu.memory_space<vmem>>, vector<1x80x50xf32>
    %133 = vector.shape_cast %132 : vector<1x80x50xf32> to vector<80x50xf32>
    %cst_90 = arith.constant dense<0.000000e+00> : vector<8x50xf32>
    %134 = tpu.matmul %131, %133, %cst_90 {dimension_numbers = #tpu.dot_dimension_numbers<[1], [0], [0], [1], [0, 0, 1, 1], [], []>} : vector<8x80xf32>, vector<80x50xf32>, vector<8x50xf32> -> vector<8x50xf32>
    %135 = arith.addf %129, %134 : vector<8x50xf32>
    %136 = vector.extract_strided_slice %124 {offsets = [2, 0, 0], sizes = [1, 8, 80], strides = [1, 1, 1]} : vector<4x8x80xf32> to vector<1x8x80xf32>
    %137 = vector.shape_cast %136 : vector<1x8x80xf32> to vector<8x80xf32>
    %c2_91 = arith.constant 2 : index
    %c0_92 = arith.constant 0 : index
    %c0_93 = arith.constant 0 : index
    %138 = vector.load %arg8[%c2_91, %c0_92, %c0_93] : memref<4x80x50xf32, #tpu.memory_space<vmem>>, vector<1x80x50xf32>
    %139 = vector.shape_cast %138 : vector<1x80x50xf32> to vector<80x50xf32>
    %cst_94 = arith.constant dense<0.000000e+00> : vector<8x50xf32>
    %140 = tpu.matmul %137, %139, %cst_94 {dimension_numbers = #tpu.dot_dimension_numbers<[1], [0], [0], [1], [0, 0, 1, 1], [], []>} : vector<8x80xf32>, vector<80x50xf32>, vector<8x50xf32> -> vector<8x50xf32>
    %141 = arith.addf %135, %140 : vector<8x50xf32>
    %142 = vector.extract_strided_slice %124 {offsets = [3, 0, 0], sizes = [1, 8, 80], strides = [1, 1, 1]} : vector<4x8x80xf32> to vector<1x8x80xf32>
    %143 = vector.shape_cast %142 : vector<1x8x80xf32> to vector<8x80xf32>
    %c3_95 = arith.constant 3 : index
    %c0_96 = arith.constant 0 : index
    %c0_97 = arith.constant 0 : index
    %144 = vector.load %arg8[%c3_95, %c0_96, %c0_97] : memref<4x80x50xf32, #tpu.memory_space<vmem>>, vector<1x80x50xf32>
    %145 = vector.shape_cast %144 : vector<1x80x50xf32> to vector<80x50xf32>
    %cst_98 = arith.constant dense<0.000000e+00> : vector<8x50xf32>
    %146 = tpu.matmul %143, %145, %cst_98 {dimension_numbers = #tpu.dot_dimension_numbers<[1], [0], [0], [1], [0, 0, 1, 1], [], []>} : vector<8x80xf32>, vector<80x50xf32>, vector<8x50xf32> -> vector<8x50xf32>
    %147 = arith.addf %141, %146 : vector<8x50xf32>
    %c0_99 = arith.constant 0 : index
    %c0_100 = arith.constant 0 : index
    %148 = vector.load %arg9[%c0_99, %c0_100] : memref<1x50xf32, #tpu.memory_space<vmem>>, vector<1x50xf32>
    %149 = vector.broadcast %148 : vector<1x50xf32> to vector<8x50xf32>
    %150 = arith.addf %147, %149 : vector<8x50xf32>
    %cst_101 = arith.constant 0.000000e+00 : f32
    %151 = vector.broadcast %cst_101 : f32 to vector<8x50xf32>
    %152 = arith.maximumf %150, %151 : vector<8x50xf32>
    %c0_102 = arith.constant 0 : index
    %c0_103 = arith.constant 0 : index
    %153 = vector.load %arg10[%c0_102, %c0_103] : memref<50x10xf32, #tpu.memory_space<vmem>>, vector<50x10xf32>
    %cst_104 = arith.constant dense<0.000000e+00> : vector<8x10xf32>
    %154 = tpu.matmul %152, %153, %cst_104 {dimension_numbers = #tpu.dot_dimension_numbers<[1], [0], [0], [1], [0, 0, 1, 1], [], []>} : vector<8x50xf32>, vector<50x10xf32>, vector<8x10xf32> -> vector<8x10xf32>
    %c0_105 = arith.constant 0 : index
    %c0_106 = arith.constant 0 : index
    %155 = vector.load %arg11[%c0_105, %c0_106] : memref<1x10xf32, #tpu.memory_space<vmem>>, vector<1x10xf32>
    %156 = vector.broadcast %155 : vector<1x10xf32> to vector<8x10xf32>
    %157 = arith.addf %154, %156 : vector<8x10xf32>
    %cst_107 = arith.constant dense<0xFF800000> : vector<8xf32>
    %158 = vector.multi_reduction <maximumf>, %157, %cst_107 [1] : vector<8x10xf32> to vector<8xf32>
    %159 = vector.shape_cast %158 : vector<8xf32> to vector<8x1xf32>
    %160 = vector.broadcast %159 : vector<8x1xf32> to vector<8x10xf32>
    %161 = arith.subf %157, %160 : vector<8x10xf32>
    %162 = math.exp %161 : vector<8x10xf32>
    %cst_108 = arith.constant dense<0.000000e+00> : vector<8xf32>
    %163 = vector.multi_reduction <add>, %162, %cst_108 [1] : vector<8x10xf32> to vector<8xf32>
    %164 = vector.shape_cast %163 : vector<8xf32> to vector<8x1xf32>
    %165 = math.log %164 : vector<8x1xf32>
    %166 = arith.addf %165, %159 : vector<8x1xf32>
    %167 = vector.broadcast %166 : vector<8x1xf32> to vector<8x10xf32>
    %168 = arith.subf %157, %167 : vector<8x10xf32>
    %c0_109 = arith.constant 0 : index
    %c0_110 = arith.constant 0 : index
    %169 = vector.load %arg12[%c0_109, %c0_110] : memref<8x10xf32, #tpu.memory_space<vmem>>, vector<8x10xf32>
    tpu.vector_store %arg12[%c0_109, %c0_110], %168 {strides = array<i32>} : memref<8x10xf32, #tpu.memory_space<vmem>>, vector<8x10xf32>,
    return
  }
  func.func @transform_0(%arg0: i32) -> (i32, i32, i32) {
    %c0_i32 = arith.constant 0 : i32
    %c0_i32_0 = arith.constant 0 : i32
    %c0_i32_1 = arith.constant 0 : i32
    return %c0_i32, %arg0, %c0_i32_0 : i32, i32, i32
  }
  func.func @transform_1(%arg0: i32) -> (i32, i32, i32) {
    %c0_i32 = arith.constant 0 : i32
    %c0_i32_0 = arith.constant 0 : i32
    %c0_i32_1 = arith.constant 0 : i32
    %c0_i32_2 = arith.constant 0 : i32
    return %c0_i32, %c0_i32_0, %c0_i32_1 : i32, i32, i32
  }
  func.func @transform_2(%arg0: i32) -> (i32, i32, i32) {
    %c0_i32 = arith.constant 0 : i32
    %c0_i32_0 = arith.constant 0 : i32
    %c0_i32_1 = arith.constant 0 : i32
    %c0_i32_2 = arith.constant 0 : i32
    return %c0_i32, %c0_i32_0, %c0_i32_1 : i32, i32, i32
  }
  func.func @transform_3(%arg0: i32) -> (i32, i32) {
    %c0_i32 = arith.constant 0 : i32
    %c0_i32_0 = arith.constant 0 : i32
    %c0_i32_1 = arith.constant 0 : i32
    return %c0_i32, %c0_i32_0 : i32, i32
  }
  func.func @transform_4(%arg0: i32) -> (i32, i32, i32) {
    %c0_i32 = arith.constant 0 : i32
    %c0_i32_0 = arith.constant 0 : i32
    %c0_i32_1 = arith.constant 0 : i32
    %c0_i32_2 = arith.constant 0 : i32
    return %c0_i32, %c0_i32_0, %c0_i32_1 : i32, i32, i32
  }
  func.func @transform_5(%arg0: i32) -> (i32, i32, i32) {
    %c0_i32 = arith.constant 0 : i32
    %c0_i32_0 = arith.constant 0 : i32
    %c0_i32_1 = arith.constant 0 : i32
    %c0_i32_2 = arith.constant 0 : i32
    return %c0_i32, %c0_i32_0, %c0_i32_1 : i32, i32, i32
  }
  func.func @transform_6(%arg0: i32) -> (i32, i32) {
    %c0_i32 = arith.constant 0 : i32
    %c0_i32_0 = arith.constant 0 : i32
    %c0_i32_1 = arith.constant 0 : i32
    return %c0_i32, %c0_i32_0 : i32, i32
  }
  func.func @transform_7(%arg0: i32) -> (i32, i32, i32) {
    %c0_i32 = arith.constant 0 : i32
    %c0_i32_0 = arith.constant 0 : i32
    %c0_i32_1 = arith.constant 0 : i32
    %c0_i32_2 = arith.constant 0 : i32
    return %c0_i32, %c0_i32_0, %c0_i32_1 : i32, i32, i32
  }
  func.func @transform_8(%arg0: i32) -> (i32, i32) {
    %c0_i32 = arith.constant 0 : i32
    %c0_i32_0 = arith.constant 0 : i32
    %c0_i32_1 = arith.constant 0 : i32
    return %c0_i32, %c0_i32_0 : i32, i32
  }
  func.func @transform_9(%arg0: i32) -> (i32, i32) {
    %c0_i32 = arith.constant 0 : i32
    %c0_i32_0 = arith.constant 0 : i32
    %c0_i32_1 = arith.constant 0 : i32
    return %c0_i32, %c0_i32_0 : i32, i32
  }
  func.func @transform_10(%arg0: i32) -> (i32, i32) {
    %c0_i32 = arith.constant 0 : i32
    %c0_i32_0 = arith.constant 0 : i32
    %c0_i32_1 = arith.constant 0 : i32
    return %c0_i32, %c0_i32_0 : i32, i32
  }
  func.func @transform_11(%arg0: i32) -> (i32, i32) {
    %c0_i32 = arith.constant 0 : i32
    %c0_i32_0 = arith.constant 0 : i32
    return %arg0, %c0_i32 : i32, i32
  }
}

</mosaic_0001>

<llo_original>
// kernel: tpu_custom_call.1
$region0: #{tpu_custom_call.1}
  #allocation0 [shape = 'u32[]', space=smem, size = 0x4, offset = 0x4, fixed_abs, tag = 'smem constant byte address 0x4 - core index']
  #allocation1 [shape = 'u32[72,128]{1,0:T(1,128)}', space=vmem, size = 0x9000, scoped, tag = 'internal scratch']
  %s0 = inlined_call_operand.vmem [shape: f32[28,8,28], index: 0, kind: input, shape index: {}]
  %s1 = inlined_call_operand.vmem [shape: f32[5,28,120], index: 1, kind: input, shape index: {}]
  %s2 = inlined_call_operand.vmem [shape: f32[5,28,120], index: 2, kind: input, shape index: {}]
  %s3 = inlined_call_operand.vmem [shape: f32[1,120], index: 3, kind: input, shape index: {}]
  %s4 = inlined_call_operand.vmem [shape: f32[5,120,80], index: 4, kind: input, shape index: {}]
  %s5 = inlined_call_operand.vmem [shape: f32[5,120,80], index: 5, kind: input, shape index: {}]
  %s6 = inlined_call_operand.vmem [shape: f32[1,80], index: 6, kind: input, shape index: {}]
  %s7 = inlined_call_operand.vmem [shape: f32[4,80,50], index: 7, kind: input, shape index: {}]
  %s8 = inlined_call_operand.vmem [shape: f32[1,50], index: 8, kind: input, shape index: {}]
  %s9 = inlined_call_operand.vmem [shape: f32[50,10], index: 9, kind: input, shape index: {}]
  %s10 = inlined_call_operand.vmem [shape: f32[1,10], index: 10, kind: input, shape index: {}]
  %s11 = inlined_call_operand.hbm [shape: f32[8,10], index: 11, kind: output, shape index: {}]
  %s12 = sld [smem:[#allocation0]]
  $region54: #{tpu_custom_call.1} parent=0
    _
  %s14 = ssub.s32 1, %s12
  %s15 = scalar_select 0, %s14, %s12
  $region1: #{tpu_custom_call.1} parent=0
    #allocation2 [shape = 'u8[4096]{0}', space=vmem, size = 0x1000, scoped, tag = 'output window, operand 0, single buffered']
    #allocation3 [shape = 's32[1]{0}', space=sflag, size = 0x4, scoped, tag = 'scoped memory for tpu_custom_call.1']
    %16 = vsyncpa [#allocation3], 0
    // Predicated region
    $region2: #{tpu_custom_call.1} parent=1 // pred_check
      _
    $region3: #{tpu_custom_call.1} parent=1 // pred_check_branch
      %18 = sbr.rel (0) target = $region5
    $region4: #{tpu_custom_call.1} parent=1 // pred_region
      _
    $region5: #{tpu_custom_call.1} parent=1 // pred_fallthru
      _
    // Predicated region
    $region6: #{tpu_custom_call.1} parent=1 // pred_check
      _
    $region7: #{tpu_custom_call.1} parent=1 // pred_check_branch
      %20 = sbr.rel (0) target = $region9
    $region8: #{tpu_custom_call.1} parent=1 // pred_region
      _
    $region9: #{tpu_custom_call.1} parent=1 // pred_fallthru
      _
    // Predicated region
    $region10: #{tpu_custom_call.1} parent=1 // pred_check
      _
    $region11: #{tpu_custom_call.1} parent=1 // pred_check_branch
      %22 = sbr.rel (0) target = $region13
    $region12: #{tpu_custom_call.1} parent=1 // pred_region
      _
    $region13: #{tpu_custom_call.1} parent=1 // pred_fallthru
      _
    // Predicated region
    $region14: #{tpu_custom_call.1} parent=1 // pred_check
      _
    $region15: #{tpu_custom_call.1} parent=1 // pred_check_branch
      %24 = sbr.rel (0) target = $region17
    $region16: #{tpu_custom_call.1} parent=1 // pred_region
      _
    $region17: #{tpu_custom_call.1} parent=1 // pred_fallthru
      _
    // Predicated region
    $region18: #{tpu_custom_call.1} parent=1 // pred_check
      _
    $region19: #{tpu_custom_call.1} parent=1 // pred_check_branch
      %26 = sbr.rel (0) target = $region21
    $region20: #{tpu_custom_call.1} parent=1 // pred_region
      _
    $region21: #{tpu_custom_call.1} parent=1 // pred_fallthru
      _
    // Predicated region
    $region22: #{tpu_custom_call.1} parent=1 // pred_check
      _
    $region23: #{tpu_custom_call.1} parent=1 // pred_check_branch
      %28 = sbr.rel (0) target = $region25
    $region24: #{tpu_custom_call.1} parent=1 // pred_region
      _
    $region25: #{tpu_custom_call.1} parent=1 // pred_fallthru
      _
    // Predicated region
    $region26: #{tpu_custom_call.1} parent=1 // pred_check
      _
    $region27: #{tpu_custom_call.1} parent=1 // pred_check_branch
      %30 = sbr.rel (0) target = $region29
    $region28: #{tpu_custom_call.1} parent=1 // pred_region
      _
    $region29: #{tpu_custom_call.1} parent=1 // pred_fallthru
      _
    // Predicated region
    $region30: #{tpu_custom_call.1} parent=1 // pred_check
      _
    $region31: #{tpu_custom_call.1} parent=1 // pred_check_branch
      %32 = sbr.rel (0) target = $region33
    $region32: #{tpu_custom_call.1} parent=1 // pred_region
      _
    $region33: #{tpu_custom_call.1} parent=1 // pred_fallthru
      _
    // Predicated region
    $region34: #{tpu_custom_call.1} parent=1 // pred_check
      _
    $region35: #{tpu_custom_call.1} parent=1 // pred_check_branch
      %34 = sbr.rel (0) target = $region37
    $region36: #{tpu_custom_call.1} parent=1 // pred_region
      _
    $region37: #{tpu_custom_call.1} parent=1 // pred_fallthru
      _
    // Predicated region
    $region38: #{tpu_custom_call.1} parent=1 // pred_check
      _
    $region39: #{tpu_custom_call.1} parent=1 // pred_check_branch
      %36 = sbr.rel (0) target = $region41
    $region40: #{tpu_custom_call.1} parent=1 // pred_region
      _
    $region41: #{tpu_custom_call.1} parent=1 // pred_fallthru
      _
    // Predicated region
    $region42: #{tpu_custom_call.1} parent=1 // pred_check
      _
    $region43: #{tpu_custom_call.1} parent=1 // pred_check_branch
      %38 = sbr.rel (0) target = $region45
    $region44: #{tpu_custom_call.1} parent=1 // pred_region
      _
    $region45: #{tpu_custom_call.1} parent=1 // pred_fallthru
      _
    %v39 = vld [vmem:[%s0] sm:$0xff]
    %v40 = vld [vmem:[%s0 + $0x8] sm:$0xff]
    %v41 = vld [vmem:[%s0 + $0x10] sm:$0xff]
    %v42 = vld [vmem:[%s0 + $0x18] sm:$0xff]
    %v43 = vld [vmem:[%s0 + $0x20] sm:$0xff]
    %v44 = vld [vmem:[%s0 + $0x28] sm:$0xff]
    %v45 = vld [vmem:[%s0 + $0x30] sm:$0xff]
    %v46 = vld [vmem:[%s0 + $0x38] sm:$0xff]
    %v47 = vld [vmem:[%s0 + $0x40] sm:$0xff]
    %v48 = vld [vmem:[%s0 + $0x48] sm:$0xff]
    %v49 = vld [vmem:[%s0 + $0x50] sm:$0xff]
    %v50 = vld [vmem:[%s0 + $0x58] sm:$0xff]
    %v51 = vld [vmem:[%s0 + $0x60] sm:$0xff]
    %v52 = vld [vmem:[%s0 + $0x68] sm:$0xff]
    %v53 = vld [vmem:[%s0 + $0x70] sm:$0xff]
    %v54 = vld [vmem:[%s0 + $0x78] sm:$0xff]
    %v55 = vld [vmem:[%s0 + $0x80] sm:$0xff]
    %v56 = vld [vmem:[%s0 + $0x88] sm:$0xff]
    %v57 = vld [vmem:[%s0 + $0x90] sm:$0xff]
    %v58 = vld [vmem:[%s0 + $0x98] sm:$0xff]
    %v59 = vld [vmem:[%s0 + $0xa0] sm:$0xff]
    %v60 = vld [vmem:[%s0 + $0xa8] sm:$0xff]
    %v61 = vld [vmem:[%s0 + $0xb0] sm:$0xff]
    %v62 = vld [vmem:[%s0 + $0xb8] sm:$0xff]
    %v63 = vld [vmem:[%s0 + $0xc0] sm:$0xff]
    %v64 = vld [vmem:[%s0 + $0xc8] sm:$0xff]
    %v65 = vld [vmem:[%s0 + $0xd0] sm:$0xff]
    %v66 = vld [vmem:[%s0 + $0xd8] sm:$0xff]
    %v67 = vld [vmem:[%s1] sm:$0xff]
    %v68 = vld [vmem:[%s1 + $0x8] sm:$0xff]
    %v69 = vld [vmem:[%s1 + $0x10] sm:$0xff]
    %v70 = vld [vmem:[%s1 + $0x18] sm:$0xf]
    %v71 = vld [vmem:[%s2] sm:$0xff]
    %v72 = vld [vmem:[%s2 + $0x8] sm:$0xff]
    %v73 = vld [vmem:[%s2 + $0x10] sm:$0xff]
    %v74 = vld [vmem:[%s2 + $0x18] sm:$0xf]
    %s75 = scalar_lea.vmem %s1, 32
    %v76 = vld [vmem:[%s75] sm:$0xff]
    %v77 = vld [vmem:[%s75 + $0x8] sm:$0xff]
    %v78 = vld [vmem:[%s75 + $0x10] sm:$0xff]
    %v79 = vld [vmem:[%s75 + $0x18] sm:$0xf]
    %vm80 = vcmask 228352
    %v82 = vsel %vm80, %v40, 0
    %v85 = vsel %vm80, %v41, 0
    %v88 = vsel %vm80, %v42, 0
    %v91 = vsel %vm80, %v43, 0
    %v94 = vsel %vm80, %v44, 0
    %v97 = vsel %vm80, %v45, 0
    %v100 = vsel %vm80, %v46, 0
    %v103 = vsel %vm80, %v47, 0
    %v106 = vsel %vm80, %v48, 0
    %v109 = vsel %vm80, %v49, 0
    %v112 = vsel %vm80, %v50, 0
    %v115 = vsel %vm80, %v51, 0
    %v118 = vsel %vm80, %v52, 0
    %v121 = vsel %vm80, %v53, 0
    %v124 = vsel %vm80, %v54, 0
    %v127 = vsel %vm80, %v55, 0
    %v130 = vsel %vm80, %v56, 0
    %v133 = vsel %vm80, %v57, 0
    %v136 = vsel %vm80, %v58, 0
    %v139 = vsel %vm80, %v59, 0
    %v142 = vsel %vm80, %v60, 0
    %v145 = vsel %vm80, %v61, 0
    %v148 = vsel %vm80, %v62, 0
    %v151 = vsel %vm80, %v63, 0
    %vm153 = vcmask 1043456
    %v155 = vsel %vm153, %v79, 0
    %157 = vmatpush.msra.mxu0 0.0
    %158 = vmatpush.msra.mxu0 0.0
    %159 = vmatpush.msra.mxu0 0.0
    %160 = vmatpush.msra.mxu0 0.0
    %161 = vmatpush.msra.mxu0 0.0
    %162 = vmatpush.msra.mxu0 0.0
    %163 = vmatpush.msra.mxu0 0.0
    %164 = vmatpush.msra.mxu0 0.0
    %165 = vmatpush.msra.mxu0 0.0
    %166 = vmatpush.msra.mxu0 0.0
    %167 = vmatpush.msra.mxu0 0.0
    %168 = vmatpush.msra.mxu0 0.0
    %169 = vmatpush.msra.mxu0 %v155
    %170 = vmatpush.msra.mxu0 %v78
    %171 = vmatpush.msra.mxu0 %v77
    %172 = vmatpush.msra.mxu0 %v76
    %173 = vmatmul.f32.gmra.mxu0 %v82
    %v174 = vpop.f32.mrf.mxu0
    %v175 = vadd.f32 0.0, %v174
    %176 = vmatmul.f32.gmra.mxu0 %v85
    %v177 = vpop.f32.mrf.mxu0
    %v178 = vadd.f32 0.0, %v177
    %179 = vmatmul.f32.gmra.mxu0 %v88
    %v180 = vpop.f32.mrf.mxu0
    %v181 = vadd.f32 0.0, %v180
    %182 = vmatmul.f32.gmra.mxu0 %v91
    %v183 = vpop.f32.mrf.mxu0
    %v184 = vadd.f32 0.0, %v183
    %185 = vmatmul.f32.gmra.mxu0 %v94
    %v186 = vpop.f32.mrf.mxu0
    %v187 = vadd.f32 0.0, %v186
    %188 = vmatmul.f32.gmra.mxu0 %v97
    %v189 = vpop.f32.mrf.mxu0
    %v190 = vadd.f32 0.0, %v189
    %191 = vmatmul.f32.gmra.mxu0 %v100
    %v192 = vpop.f32.mrf.mxu0
    %v193 = vadd.f32 0.0, %v192
    %194 = vmatmul.f32.gmra.mxu0 %v103
    %v195 = vpop.f32.mrf.mxu0
    %v196 = vadd.f32 0.0, %v195
    %197 = vmatmul.f32.gmra.mxu0 %v106
    %v198 = vpop.f32.mrf.mxu0
    %v199 = vadd.f32 0.0, %v198
    %200 = vmatmul.f32.gmra.mxu0 %v109
    %v201 = vpop.f32.mrf.mxu0
    %v202 = vadd.f32 0.0, %v201
    %203 = vmatmul.f32.gmra.mxu0 %v112
    %v204 = vpop.f32.mrf.mxu0
    %v205 = vadd.f32 0.0, %v204
    %206 = vmatmul.f32.gmra.mxu0 %v115
    %v207 = vpop.f32.mrf.mxu0
    %v208 = vadd.f32 0.0, %v207
    %209 = vmatmul.f32.gmra.mxu0 %v118
    %v210 = vpop.f32.mrf.mxu0
    %v211 = vadd.f32 0.0, %v210
    %212 = vmatmul.f32.gmra.mxu0 %v121
    %v213 = vpop.f32.mrf.mxu0
    %v214 = vadd.f32 0.0, %v213
    %215 = vmatmul.f32.gmra.mxu0 %v124
    %v216 = vpop.f32.mrf.mxu0
    %v217 = vadd.f32 0.0, %v216
    %218 = vmatmul.f32.gmra.mxu0 %v127
    %v219 = vpop.f32.mrf.mxu0
    %v220 = vadd.f32 0.0, %v219
    %221 = vmatmul.f32.gmra.mxu0 %v130
    %v222 = vpop.f32.mrf.mxu0
    %v223 = vadd.f32 0.0, %v222
    %224 = vmatmul.f32.gmra.mxu0 %v133
    %v225 = vpop.f32.mrf.mxu0
    %v226 = vadd.f32 0.0, %v225
    %227 = vmatmul.f32.gmra.mxu0 %v136
    %v228 = vpop.f32.mrf.mxu0
    %v229 = vadd.f32 0.0, %v228
    %230 = vmatmul.f32.gmra.mxu0 %v139
    %v231 = vpop.f32.mrf.mxu0
    %v232 = vadd.f32 0.0, %v231
    %233 = vmatmul.f32.gmra.mxu0 %v142
    %v234 = vpop.f32.mrf.mxu0
    %v235 = vadd.f32 0.0, %v234
    %236 = vmatmul.f32.gmra.mxu0 %v145
    %v237 = vpop.f32.mrf.mxu0
    %v238 = vadd.f32 0.0, %v237
    %239 = vmatmul.f32.gmra.mxu0 %v148
    %v240 = vpop.f32.mrf.mxu0
    %v241 = vadd.f32 0.0, %v240
    %242 = vmatmul.f32.gmra.mxu0 %v151
    %v243 = vpop.f32.mrf.mxu0
    %v244 = vadd.f32 0.0, %v243
    %245 = vdwg.mxu0
    %s246 = scalar_lea.vmem %s2, 32
    %v247 = vld [vmem:[%s246] sm:$0xff]
    %v248 = vld [vmem:[%s246 + $0x8] sm:$0xff]
    %v249 = vld [vmem:[%s246 + $0x10] sm:$0xff]
    %v250 = vld [vmem:[%s246 + $0x18] sm:$0xf]
    %v252 = vsel %vm153, %v250, 0
    %254 = vmatpush.msra.mxu0 0.0
    %255 = vmatpush.msra.mxu0 0.0
    %256 = vmatpush.msra.mxu0 0.0
    %257 = vmatpush.msra.mxu0 0.0
    %258 = vmatpush.msra.mxu0 0.0
    %259 = vmatpush.msra.mxu0 0.0
    %260 = vmatpush.msra.mxu0 0.0
    %261 = vmatpush.msra.mxu0 0.0
    %262 = vmatpush.msra.mxu0 0.0
    %263 = vmatpush.msra.mxu0 0.0
    %264 = vmatpush.msra.mxu0 0.0
    %265 = vmatpush.msra.mxu0 0.0
    %266 = vmatpush.msra.mxu0 %v252
    %267 = vmatpush.msra.mxu0 %v249
    %268 = vmatpush.msra.mxu0 %v248
    %269 = vmatpush.msra.mxu0 %v247
    %270 = vmatmul.f32.gmra.mxu0 %v82
    %v271 = vpop.f32.mrf.mxu0
    %v272 = vadd.f32 0.0, %v271
    %273 = vmatmul.f32.gmra.mxu0 %v85
    %v274 = vpop.f32.mrf.mxu0
    %v275 = vadd.f32 0.0, %v274
    %276 = vmatmul.f32.gmra.mxu0 %v88
    %v277 = vpop.f32.mrf.mxu0
    %v278 = vadd.f32 0.0, %v277
    %279 = vmatmul.f32.gmra.mxu0 %v91
    %v280 = vpop.f32.mrf.mxu0
    %v281 = vadd.f32 0.0, %v280
    %282 = vmatmul.f32.gmra.mxu0 %v94
    %v283 = vpop.f32.mrf.mxu0
    %v284 = vadd.f32 0.0, %v283
    %285 = vmatmul.f32.gmra.mxu0 %v97
    %v286 = vpop.f32.mrf.mxu0
    %v287 = vadd.f32 0.0, %v286
    %288 = vmatmul.f32.gmra.mxu0 %v100
    %v289 = vpop.f32.mrf.mxu0
    %v290 = vadd.f32 0.0, %v289
    %291 = vmatmul.f32.gmra.mxu0 %v103
    %v292 = vpop.f32.mrf.mxu0
    %v293 = vadd.f32 0.0, %v292
    %294 = vmatmul.f32.gmra.mxu0 %v106
    %v295 = vpop.f32.mrf.mxu0
    %v296 = vadd.f32 0.0, %v295
    %297 = vmatmul.f32.gmra.mxu0 %v109
    %v298 = vpop.f32.mrf.mxu0
    %v299 = vadd.f32 0.0, %v298
    %300 = vmatmul.f32.gmra.mxu0 %v112
    %v301 = vpop.f32.mrf.mxu0
    %v302 = vadd.f32 0.0, %v301
    %303 = vmatmul.f32.gmra.mxu0 %v115
    %v304 = vpop.f32.mrf.mxu0
    %v305 = vadd.f32 0.0, %v304
    %306 = vmatmul.f32.gmra.mxu0 %v118
    %v307 = vpop.f32.mrf.mxu0
    %v308 = vadd.f32 0.0, %v307
    %309 = vmatmul.f32.gmra.mxu0 %v121
    %v310 = vpop.f32.mrf.mxu0
    %v311 = vadd.f32 0.0, %v310
    %312 = vmatmul.f32.gmra.mxu0 %v124
    %v313 = vpop.f32.mrf.mxu0
    %v314 = vadd.f32 0.0, %v313
    %315 = vmatmul.f32.gmra.mxu0 %v127
    %v316 = vpop.f32.mrf.mxu0
    %v317 = vadd.f32 0.0, %v316
    %318 = vmatmul.f32.gmra.mxu0 %v130
    %v319 = vpop.f32.mrf.mxu0
    %v320 = vadd.f32 0.0, %v319
    %321 = vmatmul.f32.gmra.mxu0 %v133
    %v322 = vpop.f32.mrf.mxu0
    %v323 = vadd.f32 0.0, %v322
    %324 = vmatmul.f32.gmra.mxu0 %v136
    %v325 = vpop.f32.mrf.mxu0
    %v326 = vadd.f32 0.0, %v325
    %327 = vmatmul.f32.gmra.mxu0 %v139
    %v328 = vpop.f32.mrf.mxu0
    %v329 = vadd.f32 0.0, %v328
    %330 = vmatmul.f32.gmra.mxu0 %v142
    %v331 = vpop.f32.mrf.mxu0
    %v332 = vadd.f32 0.0, %v331
    %333 = vmatmul.f32.gmra.mxu0 %v145
    %v334 = vpop.f32.mrf.mxu0
    %v335 = vadd.f32 0.0, %v334
    %336 = vmatmul.f32.gmra.mxu0 %v148
    %v337 = vpop.f32.mrf.mxu0
    %v338 = vadd.f32 0.0, %v337
    %339 = vmatmul.f32.gmra.mxu0 %v151
    %v340 = vpop.f32.mrf.mxu0
    %v341 = vadd.f32 0.0, %v340
    %342 = vdwg.mxu0
    %v344 = vsel %vm80, %v39, 0
    %v347 = vsel %vm153, %v70, 0
    %349 = vmatpush.msra.mxu0 0.0
    %350 = vmatpush.msra.mxu0 0.0
    %351 = vmatpush.msra.mxu0 0.0
    %352 = vmatpush.msra.mxu0 0.0
    %353 = vmatpush.msra.mxu0 0.0
    %354 = vmatpush.msra.mxu0 0.0
    %355 = vmatpush.msra.mxu0 0.0
    %356 = vmatpush.msra.mxu0 0.0
    %357 = vmatpush.msra.mxu0 0.0
    %358 = vmatpush.msra.mxu0 0.0
    %359 = vmatpush.msra.mxu0 0.0
    %360 = vmatpush.msra.mxu0 0.0
    %361 = vmatpush.msra.mxu0 %v347
    %362 = vmatpush.msra.mxu0 %v69
    %363 = vmatpush.msra.mxu0 %v68
    %364 = vmatpush.msra.mxu0 %v67
    %365 = vmatmul.f32.gmra.mxu0 %v344
    %v366 = vpop.f32.mrf.mxu0
    %v367 = vadd.f32 %v175, %v366
    %368 = vmatmul.f32.gmra.mxu0 %v82
    %v369 = vpop.f32.mrf.mxu0
    %v370 = vadd.f32 %v178, %v369
    %371 = vmatmul.f32.gmra.mxu0 %v85
    %v372 = vpop.f32.mrf.mxu0
    %v373 = vadd.f32 %v181, %v372
    %374 = vmatmul.f32.gmra.mxu0 %v88
    %v375 = vpop.f32.mrf.mxu0
    %v376 = vadd.f32 %v184, %v375
    %377 = vmatmul.f32.gmra.mxu0 %v91
    %v378 = vpop.f32.mrf.mxu0
    %v379 = vadd.f32 %v187, %v378
    %380 = vmatmul.f32.gmra.mxu0 %v94
    %v381 = vpop.f32.mrf.mxu0
    %v382 = vadd.f32 %v190, %v381
    %383 = vmatmul.f32.gmra.mxu0 %v97
    %v384 = vpop.f32.mrf.mxu0
    %v385 = vadd.f32 %v193, %v384
    %386 = vmatmul.f32.gmra.mxu0 %v100
    %v387 = vpop.f32.mrf.mxu0
    %v388 = vadd.f32 %v196, %v387
    %389 = vmatmul.f32.gmra.mxu0 %v103
    %v390 = vpop.f32.mrf.mxu0
    %v391 = vadd.f32 %v199, %v390
    %392 = vmatmul.f32.gmra.mxu0 %v106
    %v393 = vpop.f32.mrf.mxu0
    %v394 = vadd.f32 %v202, %v393
    %395 = vmatmul.f32.gmra.mxu0 %v109
    %v396 = vpop.f32.mrf.mxu0
    %v397 = vadd.f32 %v205, %v396
    %398 = vmatmul.f32.gmra.mxu0 %v112
    %v399 = vpop.f32.mrf.mxu0
    %v400 = vadd.f32 %v208, %v399
    %401 = vmatmul.f32.gmra.mxu0 %v115
    %v402 = vpop.f32.mrf.mxu0
    %v403 = vadd.f32 %v211, %v402
    %404 = vmatmul.f32.gmra.mxu0 %v118
    %v405 = vpop.f32.mrf.mxu0
    %v406 = vadd.f32 %v214, %v405
    %407 = vmatmul.f32.gmra.mxu0 %v121
    %v408 = vpop.f32.mrf.mxu0
    %v409 = vadd.f32 %v217, %v408
    %410 = vmatmul.f32.gmra.mxu0 %v124
    %v411 = vpop.f32.mrf.mxu0
    %v412 = vadd.f32 %v220, %v411
    %413 = vmatmul.f32.gmra.mxu0 %v127
    %v414 = vpop.f32.mrf.mxu0
    %v415 = vadd.f32 %v223, %v414
    %416 = vmatmul.f32.gmra.mxu0 %v130
    %v417 = vpop.f32.mrf.mxu0
    %v418 = vadd.f32 %v226, %v417
    %419 = vmatmul.f32.gmra.mxu0 %v133
    %v420 = vpop.f32.mrf.mxu0
    %v421 = vadd.f32 %v229, %v420
    %422 = vmatmul.f32.gmra.mxu0 %v136
    %v423 = vpop.f32.mrf.mxu0
    %v424 = vadd.f32 %v232, %v423
    %425 = vmatmul.f32.gmra.mxu0 %v139
    %v426 = vpop.f32.mrf.mxu0
    %v427 = vadd.f32 %v235, %v426
    %428 = vmatmul.f32.gmra.mxu0 %v142
    %v429 = vpop.f32.mrf.mxu0
    %v430 = vadd.f32 %v238, %v429
    %431 = vmatmul.f32.gmra.mxu0 %v145
    %v432 = vpop.f32.mrf.mxu0
    %v433 = vadd.f32 %v241, %v432
    %434 = vmatmul.f32.gmra.mxu0 %v148
    %v435 = vpop.f32.mrf.mxu0
    %v436 = vadd.f32 %v244, %v435
    %437 = vdwg.mxu0
    %v439 = vsel %vm153, %v74, 0
    %441 = vmatpush.msra.mxu0 0.0
    %442 = vmatpush.msra.mxu0 0.0
    %443 = vmatpush.msra.mxu0 0.0
    %444 = vmatpush.msra.mxu0 0.0
    %445 = vmatpush.msra.mxu0 0.0
    %446 = vmatpush.msra.mxu0 0.0
    %447 = vmatpush.msra.mxu0 0.0
    %448 = vmatpush.msra.mxu0 0.0
    %449 = vmatpush.msra.mxu0 0.0
    %450 = vmatpush.msra.mxu0 0.0
    %451 = vmatpush.msra.mxu0 0.0
    %452 = vmatpush.msra.mxu0 0.0
    %453 = vmatpush.msra.mxu0 %v439
    %454 = vmatpush.msra.mxu0 %v73
    %455 = vmatpush.msra.mxu0 %v72
    %456 = vmatpush.msra.mxu0 %v71
    %457 = vmatmul.f32.gmra.mxu0 %v344
    %v458 = vpop.f32.mrf.mxu0
    %v459 = vadd.f32 %v272, %v458
    %460 = vmatmul.f32.gmra.mxu0 %v82
    %v461 = vpop.f32.mrf.mxu0
    %v462 = vadd.f32 %v275, %v461
    %463 = vmatmul.f32.gmra.mxu0 %v85
    %v464 = vpop.f32.mrf.mxu0
    %v465 = vadd.f32 %v278, %v464
    %466 = vmatmul.f32.gmra.mxu0 %v88
    %v467 = vpop.f32.mrf.mxu0
    %v468 = vadd.f32 %v281, %v467
    %469 = vmatmul.f32.gmra.mxu0 %v91
    %v470 = vpop.f32.mrf.mxu0
    %v471 = vadd.f32 %v284, %v470
    %472 = vmatmul.f32.gmra.mxu0 %v94
    %v473 = vpop.f32.mrf.mxu0
    %v474 = vadd.f32 %v287, %v473
    %475 = vmatmul.f32.gmra.mxu0 %v97
    %v476 = vpop.f32.mrf.mxu0
    %v477 = vadd.f32 %v290, %v476
    %478 = vmatmul.f32.gmra.mxu0 %v100
    %v479 = vpop.f32.mrf.mxu0
    %v480 = vadd.f32 %v293, %v479
    %481 = vmatmul.f32.gmra.mxu0 %v103
    %v482 = vpop.f32.mrf.mxu0
    %v483 = vadd.f32 %v296, %v482
    %484 = vmatmul.f32.gmra.mxu0 %v106
    %v485 = vpop.f32.mrf.mxu0
    %v486 = vadd.f32 %v299, %v485
    %487 = vmatmul.f32.gmra.mxu0 %v109
    %v488 = vpop.f32.mrf.mxu0
    %v489 = vadd.f32 %v302, %v488
    %490 = vmatmul.f32.gmra.mxu0 %v112
    %v491 = vpop.f32.mrf.mxu0
    %v492 = vadd.f32 %v305, %v491
    %493 = vmatmul.f32.gmra.mxu0 %v115
    %v494 = vpop.f32.mrf.mxu0
    %v495 = vadd.f32 %v308, %v494
    %496 = vmatmul.f32.gmra.mxu0 %v118
    %v497 = vpop.f32.mrf.mxu0
    %v498 = vadd.f32 %v311, %v497
    %499 = vmatmul.f32.gmra.mxu0 %v121
    %v500 = vpop.f32.mrf.mxu0
    %v501 = vadd.f32 %v314, %v500
    %502 = vmatmul.f32.gmra.mxu0 %v124
    %v503 = vpop.f32.mrf.mxu0
    %v504 = vadd.f32 %v317, %v503
    %505 = vmatmul.f32.gmra.mxu0 %v127
    %v506 = vpop.f32.mrf.mxu0
    %v507 = vadd.f32 %v320, %v506
    %508 = vmatmul.f32.gmra.mxu0 %v130
    %v509 = vpop.f32.mrf.mxu0
    %v510 = vadd.f32 %v323, %v509
    %511 = vmatmul.f32.gmra.mxu0 %v133
    %v512 = vpop.f32.mrf.mxu0
    %v513 = vadd.f32 %v326, %v512
    %514 = vmatmul.f32.gmra.mxu0 %v136
    %v515 = vpop.f32.mrf.mxu0
    %v516 = vadd.f32 %v329, %v515
    %517 = vmatmul.f32.gmra.mxu0 %v139
    %v518 = vpop.f32.mrf.mxu0
    %v519 = vadd.f32 %v332, %v518
    %520 = vmatmul.f32.gmra.mxu0 %v142
    %v521 = vpop.f32.mrf.mxu0
    %v522 = vadd.f32 %v335, %v521
    %523 = vmatmul.f32.gmra.mxu0 %v145
    %v524 = vpop.f32.mrf.mxu0
    %v525 = vadd.f32 %v338, %v524
    %526 = vmatmul.f32.gmra.mxu0 %v148
    %v527 = vpop.f32.mrf.mxu0
    %v528 = vadd.f32 %v341, %v527
    %529 = vdwg.mxu0
    %s530 = scalar_lea.vmem %s1, 64
    %v531 = vld [vmem:[%s530] sm:$0xff]
    %v532 = vld [vmem:[%s530 + $0x8] sm:$0xff]
    %v533 = vld [vmem:[%s530 + $0x10] sm:$0xff]
    %v534 = vld [vmem:[%s530 + $0x18] sm:$0xf]
    %v536 = vsel %vm80, %v64, 0
    %v539 = vsel %vm153, %v534, 0
    %541 = vmatpush.msra.mxu0 0.0
    %542 = vmatpush.msra.mxu0 0.0
    %543 = vmatpush.msra.mxu0 0.0
    %544 = vmatpush.msra.mxu0 0.0
    %545 = vmatpush.msra.mxu0 0.0
    %546 = vmatpush.msra.mxu0 0.0
    %547 = vmatpush.msra.mxu0 0.0
    %548 = vmatpush.msra.mxu0 0.0
    %549 = vmatpush.msra.mxu0 0.0
    %550 = vmatpush.msra.mxu0 0.0
    %551 = vmatpush.msra.mxu0 0.0
    %552 = vmatpush.msra.mxu0 0.0
    %553 = vmatpush.msra.mxu0 %v539
    %554 = vmatpush.msra.mxu0 %v533
    %555 = vmatpush.msra.mxu0 %v532
    %556 = vmatpush.msra.mxu0 %v531
    %557 = vmatmul.f32.gmra.mxu0 %v85
    %v558 = vpop.f32.mrf.mxu0
    %v559 = vadd.f32 0.0, %v558
    %560 = vmatmul.f32.gmra.mxu0 %v88
    %v561 = vpop.f32.mrf.mxu0
    %v562 = vadd.f32 0.0, %v561
    %563 = vmatmul.f32.gmra.mxu0 %v91
    %v564 = vpop.f32.mrf.mxu0
    %v565 = vadd.f32 0.0, %v564
    %566 = vmatmul.f32.gmra.mxu0 %v94
    %v567 = vpop.f32.mrf.mxu0
    %v568 = vadd.f32 0.0, %v567
    %569 = vmatmul.f32.gmra.mxu0 %v97
    %v570 = vpop.f32.mrf.mxu0
    %v571 = vadd.f32 0.0, %v570
    %572 = vmatmul.f32.gmra.mxu0 %v100
    %v573 = vpop.f32.mrf.mxu0
    %v574 = vadd.f32 0.0, %v573
    %575 = vmatmul.f32.gmra.mxu0 %v103
    %v576 = vpop.f32.mrf.mxu0
    %v577 = vadd.f32 0.0, %v576
    %578 = vmatmul.f32.gmra.mxu0 %v106
    %v579 = vpop.f32.mrf.mxu0
    %v580 = vadd.f32 0.0, %v579
    %581 = vmatmul.f32.gmra.mxu0 %v109
    %v582 = vpop.f32.mrf.mxu0
    %v583 = vadd.f32 0.0, %v582
    %584 = vmatmul.f32.gmra.mxu0 %v112
    %v585 = vpop.f32.mrf.mxu0
    %v586 = vadd.f32 0.0, %v585
    %587 = vmatmul.f32.gmra.mxu0 %v115
    %v588 = vpop.f32.mrf.mxu0
    %v589 = vadd.f32 0.0, %v588
    %590 = vmatmul.f32.gmra.mxu0 %v118
    %v591 = vpop.f32.mrf.mxu0
    %v592 = vadd.f32 0.0, %v591
    %593 = vmatmul.f32.gmra.mxu0 %v121
    %v594 = vpop.f32.mrf.mxu0
    %v595 = vadd.f32 0.0, %v594
    %596 = vmatmul.f32.gmra.mxu0 %v124
    %v597 = vpop.f32.mrf.mxu0
    %v598 = vadd.f32 0.0, %v597
    %599 = vmatmul.f32.gmra.mxu0 %v127
    %v600 = vpop.f32.mrf.mxu0
    %v601 = vadd.f32 0.0, %v600
    %602 = vmatmul.f32.gmra.mxu0 %v130
    %v603 = vpop.f32.mrf.mxu0
    %v604 = vadd.f32 0.0, %v603
    %605 = vmatmul.f32.gmra.mxu0 %v133
    %v606 = vpop.f32.mrf.mxu0
    %v607 = vadd.f32 0.0, %v606
    %608 = vmatmul.f32.gmra.mxu0 %v136
    %v609 = vpop.f32.mrf.mxu0
    %v610 = vadd.f32 0.0, %v609
    %611 = vmatmul.f32.gmra.mxu0 %v139
    %v612 = vpop.f32.mrf.mxu0
    %v613 = vadd.f32 0.0, %v612
    %614 = vmatmul.f32.gmra.mxu0 %v142
    %v615 = vpop.f32.mrf.mxu0
    %v616 = vadd.f32 0.0, %v615
    %617 = vmatmul.f32.gmra.mxu0 %v145
    %v618 = vpop.f32.mrf.mxu0
    %v619 = vadd.f32 0.0, %v618
    %620 = vmatmul.f32.gmra.mxu0 %v148
    %v621 = vpop.f32.mrf.mxu0
    %v622 = vadd.f32 0.0, %v621
    %623 = vmatmul.f32.gmra.mxu0 %v151
    %v624 = vpop.f32.mrf.mxu0
    %v625 = vadd.f32 0.0, %v624
    %626 = vmatmul.f32.gmra.mxu0 %v536
    %v627 = vpop.f32.mrf.mxu0
    %v628 = vadd.f32 0.0, %v627
    %629 = vdwg.mxu0
    %s630 = scalar_lea.vmem %s2, 64
    %v631 = vld [vmem:[%s630] sm:$0xff]
    %v632 = vld [vmem:[%s630 + $0x8] sm:$0xff]
    %v633 = vld [vmem:[%s630 + $0x10] sm:$0xff]
    %v634 = vld [vmem:[%s630 + $0x18] sm:$0xf]
    %v636 = vsel %vm153, %v634, 0
    %638 = vmatpush.msra.mxu0 0.0
    %639 = vmatpush.msra.mxu0 0.0
    %640 = vmatpush.msra.mxu0 0.0
    %641 = vmatpush.msra.mxu0 0.0
    %642 = vmatpush.msra.mxu0 0.0
    %643 = vmatpush.msra.mxu0 0.0
    %644 = vmatpush.msra.mxu0 0.0
    %645 = vmatpush.msra.mxu0 0.0
    %646 = vmatpush.msra.mxu0 0.0
    %647 = vmatpush.msra.mxu0 0.0
    %648 = vmatpush.msra.mxu0 0.0
    %649 = vmatpush.msra.mxu0 0.0
    %650 = vmatpush.msra.mxu0 %v636
    %651 = vmatpush.msra.mxu0 %v633
    %652 = vmatpush.msra.mxu0 %v632
    %653 = vmatpush.msra.mxu0 %v631
    %654 = vmatmul.f32.gmra.mxu0 %v85
    %v655 = vpop.f32.mrf.mxu0
    %v656 = vadd.f32 0.0, %v655
    %657 = vmatmul.f32.gmra.mxu0 %v88
    %v658 = vpop.f32.mrf.mxu0
    %v659 = vadd.f32 0.0, %v658
    %660 = vmatmul.f32.gmra.mxu0 %v91
    %v661 = vpop.f32.mrf.mxu0
    %v662 = vadd.f32 0.0, %v661
    %663 = vmatmul.f32.gmra.mxu0 %v94
    %v664 = vpop.f32.mrf.mxu0
    %v665 = vadd.f32 0.0, %v664
    %666 = vmatmul.f32.gmra.mxu0 %v97
    %v667 = vpop.f32.mrf.mxu0
    %v668 = vadd.f32 0.0, %v667
    %669 = vmatmul.f32.gmra.mxu0 %v100
    %v670 = vpop.f32.mrf.mxu0
    %v671 = vadd.f32 0.0, %v670
    %672 = vmatmul.f32.gmra.mxu0 %v103
    %v673 = vpop.f32.mrf.mxu0
    %v674 = vadd.f32 0.0, %v673
    %675 = vmatmul.f32.gmra.mxu0 %v106
    %v676 = vpop.f32.mrf.mxu0
    %v677 = vadd.f32 0.0, %v676
    %678 = vmatmul.f32.gmra.mxu0 %v109
    %v679 = vpop.f32.mrf.mxu0
    %v680 = vadd.f32 0.0, %v679
    %681 = vmatmul.f32.gmra.mxu0 %v112
    %v682 = vpop.f32.mrf.mxu0
    %v683 = vadd.f32 0.0, %v682
    %684 = vmatmul.f32.gmra.mxu0 %v115
    %v685 = vpop.f32.mrf.mxu0
    %v686 = vadd.f32 0.0, %v685
    %687 = vmatmul.f32.gmra.mxu0 %v118
    %v688 = vpop.f32.mrf.mxu0
    %v689 = vadd.f32 0.0, %v688
    %690 = vmatmul.f32.gmra.mxu0 %v121
    %v691 = vpop.f32.mrf.mxu0
    %v692 = vadd.f32 0.0, %v691
    %693 = vmatmul.f32.gmra.mxu0 %v124
    %v694 = vpop.f32.mrf.mxu0
    %v695 = vadd.f32 0.0, %v694
    %696 = vmatmul.f32.gmra.mxu0 %v127
    %v697 = vpop.f32.mrf.mxu0
    %v698 = vadd.f32 0.0, %v697
    %699 = vmatmul.f32.gmra.mxu0 %v130
    %v700 = vpop.f32.mrf.mxu0
    %v701 = vadd.f32 0.0, %v700
    %702 = vmatmul.f32.gmra.mxu0 %v133
    %v703 = vpop.f32.mrf.mxu0
    %v704 = vadd.f32 0.0, %v703
    %705 = vmatmul.f32.gmra.mxu0 %v136
    %v706 = vpop.f32.mrf.mxu0
    %v707 = vadd.f32 0.0, %v706
    %708 = vmatmul.f32.gmra.mxu0 %v139
    %v709 = vpop.f32.mrf.mxu0
    %v710 = vadd.f32 0.0, %v709
    %711 = vmatmul.f32.gmra.mxu0 %v142
    %v712 = vpop.f32.mrf.mxu0
    %v713 = vadd.f32 0.0, %v712
    %714 = vmatmul.f32.gmra.mxu0 %v145
    %v715 = vpop.f32.mrf.mxu0
    %v716 = vadd.f32 0.0, %v715
    %717 = vmatmul.f32.gmra.mxu0 %v148
    %v718 = vpop.f32.mrf.mxu0
    %v719 = vadd.f32 0.0, %v718
    %720 = vmatmul.f32.gmra.mxu0 %v151
    %v721 = vpop.f32.mrf.mxu0
    %v722 = vadd.f32 0.0, %v721
    %723 = vmatmul.f32.gmra.mxu0 %v536
    %v724 = vpop.f32.mrf.mxu0
    %v725 = vadd.f32 0.0, %v724
    %726 = vdwg.mxu0
    %v727 = vadd.f32 %v367, %v559
    %v728 = vadd.f32 %v370, %v562
    %v729 = vadd.f32 %v373, %v565
    %v730 = vadd.f32 %v376, %v568
    %v731 = vadd.f32 %v379, %v571
    %v732 = vadd.f32 %v382, %v574
    %v733 = vadd.f32 %v385, %v577
    %v734 = vadd.f32 %v388, %v580
    %v735 = vadd.f32 %v391, %v583
    %v736 = vadd.f32 %v394, %v586
    %v737 = vadd.f32 %v397, %v589
    %v738 = vadd.f32 %v400, %v592
    %v739 = vadd.f32 %v403, %v595
    %v740 = vadd.f32 %v406, %v598
    %v741 = vadd.f32 %v409, %v601
    %v742 = vadd.f32 %v412, %v604
    %v743 = vadd.f32 %v415, %v607
    %v744 = vadd.f32 %v418, %v610
    %v745 = vadd.f32 %v421, %v613
    %v746 = vadd.f32 %v424, %v616
    %v747 = vadd.f32 %v427, %v619
    %v748 = vadd.f32 %v430, %v622
    %v749 = vadd.f32 %v433, %v625
    %v750 = vadd.f32 %v436, %v628
    %v751 = vadd.f32 %v459, %v656
    %v752 = vadd.f32 %v462, %v659
    %v753 = vadd.f32 %v465, %v662
    %v754 = vadd.f32 %v468, %v665
    %v755 = vadd.f32 %v471, %v668
    %v756 = vadd.f32 %v474, %v671
    %v757 = vadd.f32 %v477, %v674
    %v758 = vadd.f32 %v480, %v677
    %v759 = vadd.f32 %v483, %v680
    %v760 = vadd.f32 %v486, %v683
    %v761 = vadd.f32 %v489, %v686
    %v762 = vadd.f32 %v492, %v689
    %v763 = vadd.f32 %v495, %v692
    %v764 = vadd.f32 %v498, %v695
    %v765 = vadd.f32 %v501, %v698
    %v766 = vadd.f32 %v504, %v701
    %v767 = vadd.f32 %v507, %v704
    %v768 = vadd.f32 %v510, %v707
    %v769 = vadd.f32 %v513, %v710
    %v770 = vadd.f32 %v516, %v713
    %v771 = vadd.f32 %v519, %v716
    %v772 = vadd.f32 %v522, %v719
    %v773 = vadd.f32 %v525, %v722
    %v774 = vadd.f32 %v528, %v725
    %s775 = scalar_lea.vmem %s1, 96
    %v776 = vld [vmem:[%s775] sm:$0xff]
    %v777 = vld [vmem:[%s775 + $0x8] sm:$0xff]
    %v778 = vld [vmem:[%s775 + $0x10] sm:$0xff]
    %v779 = vld [vmem:[%s775 + $0x18] sm:$0xf]
    %v781 = vsel %vm80, %v65, 0
    %v784 = vsel %vm153, %v779, 0
    %786 = vmatpush.msra.mxu0 0.0
    %787 = vmatpush.msra.mxu0 0.0
    %788 = vmatpush.msra.mxu0 0.0
    %789 = vmatpush.msra.mxu0 0.0
    %790 = vmatpush.msra.mxu0 0.0
    %791 = vmatpush.msra.mxu0 0.0
    %792 = vmatpush.msra.mxu0 0.0
    %793 = vmatpush.msra.mxu0 0.0
    %794 = vmatpush.msra.mxu0 0.0
    %795 = vmatpush.msra.mxu0 0.0
    %796 = vmatpush.msra.mxu0 0.0
    %797 = vmatpush.msra.mxu0 0.0
    %798 = vmatpush.msra.mxu0 %v784
    %799 = vmatpush.msra.mxu0 %v778
    %800 = vmatpush.msra.mxu0 %v777
    %801 = vmatpush.msra.mxu0 %v776
    %802 = vmatmul.f32.gmra.mxu0 %v88
    %v803 = vpop.f32.mrf.mxu0
    %v804 = vadd.f32 0.0, %v803
    %805 = vmatmul.f32.gmra.mxu0 %v91
    %v806 = vpop.f32.mrf.mxu0
    %v807 = vadd.f32 0.0, %v806
    %808 = vmatmul.f32.gmra.mxu0 %v94
    %v809 = vpop.f32.mrf.mxu0
    %v810 = vadd.f32 0.0, %v809
    %811 = vmatmul.f32.gmra.mxu0 %v97
    %v812 = vpop.f32.mrf.mxu0
    %v813 = vadd.f32 0.0, %v812
    %814 = vmatmul.f32.gmra.mxu0 %v100
    %v815 = vpop.f32.mrf.mxu0
    %v816 = vadd.f32 0.0, %v815
    %817 = vmatmul.f32.gmra.mxu0 %v103
    %v818 = vpop.f32.mrf.mxu0
    %v819 = vadd.f32 0.0, %v818
    %820 = vmatmul.f32.gmra.mxu0 %v106
    %v821 = vpop.f32.mrf.mxu0
    %v822 = vadd.f32 0.0, %v821
    %823 = vmatmul.f32.gmra.mxu0 %v109
    %v824 = vpop.f32.mrf.mxu0
    %v825 = vadd.f32 0.0, %v824
    %826 = vmatmul.f32.gmra.mxu0 %v112
    %v827 = vpop.f32.mrf.mxu0
    %v828 = vadd.f32 0.0, %v827
    %829 = vmatmul.f32.gmra.mxu0 %v115
    %v830 = vpop.f32.mrf.mxu0
    %v831 = vadd.f32 0.0, %v830
    %832 = vmatmul.f32.gmra.mxu0 %v118
    %v833 = vpop.f32.mrf.mxu0
    %v834 = vadd.f32 0.0, %v833
    %835 = vmatmul.f32.gmra.mxu0 %v121
    %v836 = vpop.f32.mrf.mxu0
    %v837 = vadd.f32 0.0, %v836
    %838 = vmatmul.f32.gmra.mxu0 %v124
    %v839 = vpop.f32.mrf.mxu0
    %v840 = vadd.f32 0.0, %v839
    %841 = vmatmul.f32.gmra.mxu0 %v127
    %v842 = vpop.f32.mrf.mxu0
    %v843 = vadd.f32 0.0, %v842
    %844 = vmatmul.f32.gmra.mxu0 %v130
    %v845 = vpop.f32.mrf.mxu0
    %v846 = vadd.f32 0.0, %v845
    %847 = vmatmul.f32.gmra.mxu0 %v133
    %v848 = vpop.f32.mrf.mxu0
    %v849 = vadd.f32 0.0, %v848
    %850 = vmatmul.f32.gmra.mxu0 %v136
    %v851 = vpop.f32.mrf.mxu0
    %v852 = vadd.f32 0.0, %v851
    %853 = vmatmul.f32.gmra.mxu0 %v139
    %v854 = vpop.f32.mrf.mxu0
    %v855 = vadd.f32 0.0, %v854
    %856 = vmatmul.f32.gmra.mxu0 %v142
    %v857 = vpop.f32.mrf.mxu0
    %v858 = vadd.f32 0.0, %v857
    %859 = vmatmul.f32.gmra.mxu0 %v145
    %v860 = vpop.f32.mrf.mxu0
    %v861 = vadd.f32 0.0, %v860
    %862 = vmatmul.f32.gmra.mxu0 %v148
    %v863 = vpop.f32.mrf.mxu0
    %v864 = vadd.f32 0.0, %v863
    %865 = vmatmul.f32.gmra.mxu0 %v151
    %v866 = vpop.f32.mrf.mxu0
    %v867 = vadd.f32 0.0, %v866
    %868 = vmatmul.f32.gmra.mxu0 %v536
    %v869 = vpop.f32.mrf.mxu0
    %v870 = vadd.f32 0.0, %v869
    %871 = vmatmul.f32.gmra.mxu0 %v781
    %v872 = vpop.f32.mrf.mxu0
    %v873 = vadd.f32 0.0, %v872
    %874 = vdwg.mxu0
    %s875 = scalar_lea.vmem %s2, 96
    %v876 = vld [vmem:[%s875] sm:$0xff]
    %v877 = vld [vmem:[%s875 + $0x8] sm:$0xff]
    %v878 = vld [vmem:[%s875 + $0x10] sm:$0xff]
    %v879 = vld [vmem:[%s875 + $0x18] sm:$0xf]
    %v881 = vsel %vm153, %v879, 0
    %883 = vmatpush.msra.mxu0 0.0
    %884 = vmatpush.msra.mxu0 0.0
    %885 = vmatpush.msra.mxu0 0.0
    %886 = vmatpush.msra.mxu0 0.0
    %887 = vmatpush.msra.mxu0 0.0
    %888 = vmatpush.msra.mxu0 0.0
    %889 = vmatpush.msra.mxu0 0.0
    %890 = vmatpush.msra.mxu0 0.0
    %891 = vmatpush.msra.mxu0 0.0
    %892 = vmatpush.msra.mxu0 0.0
    %893 = vmatpush.msra.mxu0 0.0
    %894 = vmatpush.msra.mxu0 0.0
    %895 = vmatpush.msra.mxu0 %v881
    %896 = vmatpush.msra.mxu0 %v878
    %897 = vmatpush.msra.mxu0 %v877
    %898 = vmatpush.msra.mxu0 %v876
    %899 = vmatmul.f32.gmra.mxu0 %v88
    %v900 = vpop.f32.mrf.mxu0
    %v901 = vadd.f32 0.0, %v900
    %902 = vmatmul.f32.gmra.mxu0 %v91
    %v903 = vpop.f32.mrf.mxu0
    %v904 = vadd.f32 0.0, %v903
    %905 = vmatmul.f32.gmra.mxu0 %v94
    %v906 = vpop.f32.mrf.mxu0
    %v907 = vadd.f32 0.0, %v906
    %908 = vmatmul.f32.gmra.mxu0 %v97
    %v909 = vpop.f32.mrf.mxu0
    %v910 = vadd.f32 0.0, %v909
    %911 = vmatmul.f32.gmra.mxu0 %v100
    %v912 = vpop.f32.mrf.mxu0
    %v913 = vadd.f32 0.0, %v912
    %914 = vmatmul.f32.gmra.mxu0 %v103
    %v915 = vpop.f32.mrf.mxu0
    %v916 = vadd.f32 0.0, %v915
    %917 = vmatmul.f32.gmra.mxu0 %v106
    %v918 = vpop.f32.mrf.mxu0
    %v919 = vadd.f32 0.0, %v918
    %920 = vmatmul.f32.gmra.mxu0 %v109
    %v921 = vpop.f32.mrf.mxu0
    %v922 = vadd.f32 0.0, %v921
    %923 = vmatmul.f32.gmra.mxu0 %v112
    %v924 = vpop.f32.mrf.mxu0
    %v925 = vadd.f32 0.0, %v924
    %926 = vmatmul.f32.gmra.mxu0 %v115
    %v927 = vpop.f32.mrf.mxu0
    %v928 = vadd.f32 0.0, %v927
    %929 = vmatmul.f32.gmra.mxu0 %v118
    %v930 = vpop.f32.mrf.mxu0
    %v931 = vadd.f32 0.0, %v930
    %932 = vmatmul.f32.gmra.mxu0 %v121
    %v933 = vpop.f32.mrf.mxu0
    %v934 = vadd.f32 0.0, %v933
    %935 = vmatmul.f32.gmra.mxu0 %v124
    %v936 = vpop.f32.mrf.mxu0
    %v937 = vadd.f32 0.0, %v936
    %938 = vmatmul.f32.gmra.mxu0 %v127
    %v939 = vpop.f32.mrf.mxu0
    %v940 = vadd.f32 0.0, %v939
    %941 = vmatmul.f32.gmra.mxu0 %v130
    %v942 = vpop.f32.mrf.mxu0
    %v943 = vadd.f32 0.0, %v942
    %944 = vmatmul.f32.gmra.mxu0 %v133
    %v945 = vpop.f32.mrf.mxu0
    %v946 = vadd.f32 0.0, %v945
    %947 = vmatmul.f32.gmra.mxu0 %v136
    %v948 = vpop.f32.mrf.mxu0
    %v949 = vadd.f32 0.0, %v948
    %950 = vmatmul.f32.gmra.mxu0 %v139
    %v951 = vpop.f32.mrf.mxu0
    %v952 = vadd.f32 0.0, %v951
    %953 = vmatmul.f32.gmra.mxu0 %v142
    %v954 = vpop.f32.mrf.mxu0
    %v955 = vadd.f32 0.0, %v954
    %956 = vmatmul.f32.gmra.mxu0 %v145
    %v957 = vpop.f32.mrf.mxu0
    %v958 = vadd.f32 0.0, %v957
    %959 = vmatmul.f32.gmra.mxu0 %v148
    %v960 = vpop.f32.mrf.mxu0
    %v961 = vadd.f32 0.0, %v960
    %962 = vmatmul.f32.gmra.mxu0 %v151
    %v963 = vpop.f32.mrf.mxu0
    %v964 = vadd.f32 0.0, %v963
    %965 = vmatmul.f32.gmra.mxu0 %v536
    %v966 = vpop.f32.mrf.mxu0
    %v967 = vadd.f32 0.0, %v966
    %968 = vmatmul.f32.gmra.mxu0 %v781
    %v969 = vpop.f32.mrf.mxu0
    %v970 = vadd.f32 0.0, %v969
    %971 = vdwg.mxu0
    %v972 = vadd.f32 %v727, %v804
    %v973 = vadd.f32 %v728, %v807
    %v974 = vadd.f32 %v729, %v810
    %v975 = vadd.f32 %v730, %v813
    %v976 = vadd.f32 %v731, %v816
    %v977 = vadd.f32 %v732, %v819
    %v978 = vadd.f32 %v733, %v822
    %v979 = vadd.f32 %v734, %v825
    %v980 = vadd.f32 %v735, %v828
    %v981 = vadd.f32 %v736, %v831
    %v982 = vadd.f32 %v737, %v834
    %v983 = vadd.f32 %v738, %v837
    %v984 = vadd.f32 %v739, %v840
    %v985 = vadd.f32 %v740, %v843
    %v986 = vadd.f32 %v741, %v846
    %v987 = vadd.f32 %v742, %v849
    %v988 = vadd.f32 %v743, %v852
    %v989 = vadd.f32 %v744, %v855
    %v990 = vadd.f32 %v745, %v858
    %v991 = vadd.f32 %v746, %v861
    %v992 = vadd.f32 %v747, %v864
    %v993 = vadd.f32 %v748, %v867
    %v994 = vadd.f32 %v749, %v870
    %v995 = vadd.f32 %v750, %v873
    %v996 = vadd.f32 %v751, %v901
    %v997 = vadd.f32 %v752, %v904
    %v998 = vadd.f32 %v753, %v907
    %v999 = vadd.f32 %v754, %v910
    %v1000 = vadd.f32 %v755, %v913
    %v1001 = vadd.f32 %v756, %v916
    %v1002 = vadd.f32 %v757, %v919
    %v1003 = vadd.f32 %v758, %v922
    %v1004 = vadd.f32 %v759, %v925
    %v1005 = vadd.f32 %v760, %v928
    %v1006 = vadd.f32 %v761, %v931
    %v1007 = vadd.f32 %v762, %v934
    %v1008 = vadd.f32 %v763, %v937
    %v1009 = vadd.f32 %v764, %v940
    %v1010 = vadd.f32 %v765, %v943
    %v1011 = vadd.f32 %v766, %v946
    %v1012 = vadd.f32 %v767, %v949
    %v1013 = vadd.f32 %v768, %v952
    %v1014 = vadd.f32 %v769, %v955
    %v1015 = vadd.f32 %v770, %v958
    %v1016 = vadd.f32 %v771, %v961
    %v1017 = vadd.f32 %v772, %v964
    %v1018 = vadd.f32 %v773, %v967
    %v1019 = vadd.f32 %v774, %v970
    %s1020 = scalar_lea.vmem %s1, 128
    %v1021 = vld [vmem:[%s1020] sm:$0xff]
    %v1022 = vld [vmem:[%s1020 + $0x8] sm:$0xff]
    %v1023 = vld [vmem:[%s1020 + $0x10] sm:$0xff]
    %v1024 = vld [vmem:[%s1020 + $0x18] sm:$0xf]
    %v1026 = vsel %vm80, %v66, 0
    %v1029 = vsel %vm153, %v1024, 0
    %1031 = vmatpush.msra.mxu0 0.0
    %1032 = vmatpush.msra.mxu0 0.0
    %1033 = vmatpush.msra.mxu0 0.0
    %1034 = vmatpush.msra.mxu0 0.0
    %1035 = vmatpush.msra.mxu0 0.0
    %1036 = vmatpush.msra.mxu0 0.0
    %1037 = vmatpush.msra.mxu0 0.0
    %1038 = vmatpush.msra.mxu0 0.0
    %1039 = vmatpush.msra.mxu0 0.0
    %1040 = vmatpush.msra.mxu0 0.0
    %1041 = vmatpush.msra.mxu0 0.0
    %1042 = vmatpush.msra.mxu0 0.0
    %1043 = vmatpush.msra.mxu0 %v1029
    %1044 = vmatpush.msra.mxu0 %v1023
    %1045 = vmatpush.msra.mxu0 %v1022
    %1046 = vmatpush.msra.mxu0 %v1021
    %1047 = vmatmul.f32.gmra.mxu0 %v91
    %v1048 = vpop.f32.mrf.mxu0
    %v1049 = vadd.f32 0.0, %v1048
    %1050 = vmatmul.f32.gmra.mxu0 %v94
    %v1051 = vpop.f32.mrf.mxu0
    %v1052 = vadd.f32 0.0, %v1051
    %1053 = vmatmul.f32.gmra.mxu0 %v97
    %v1054 = vpop.f32.mrf.mxu0
    %v1055 = vadd.f32 0.0, %v1054
    %1056 = vmatmul.f32.gmra.mxu0 %v100
    %v1057 = vpop.f32.mrf.mxu0
    %v1058 = vadd.f32 0.0, %v1057
    %1059 = vmatmul.f32.gmra.mxu0 %v103
    %v1060 = vpop.f32.mrf.mxu0
    %v1061 = vadd.f32 0.0, %v1060
    %1062 = vmatmul.f32.gmra.mxu0 %v106
    %v1063 = vpop.f32.mrf.mxu0
    %v1064 = vadd.f32 0.0, %v1063
    %1065 = vmatmul.f32.gmra.mxu0 %v109
    %v1066 = vpop.f32.mrf.mxu0
    %v1067 = vadd.f32 0.0, %v1066
    %1068 = vmatmul.f32.gmra.mxu0 %v112
    %v1069 = vpop.f32.mrf.mxu0
    %v1070 = vadd.f32 0.0, %v1069
    %1071 = vmatmul.f32.gmra.mxu0 %v115
    %v1072 = vpop.f32.mrf.mxu0
    %v1073 = vadd.f32 0.0, %v1072
    %1074 = vmatmul.f32.gmra.mxu0 %v118
    %v1075 = vpop.f32.mrf.mxu0
    %v1076 = vadd.f32 0.0, %v1075
    %1077 = vmatmul.f32.gmra.mxu0 %v121
    %v1078 = vpop.f32.mrf.mxu0
    %v1079 = vadd.f32 0.0, %v1078
    %1080 = vmatmul.f32.gmra.mxu0 %v124
    %v1081 = vpop.f32.mrf.mxu0
    %v1082 = vadd.f32 0.0, %v1081
    %1083 = vmatmul.f32.gmra.mxu0 %v127
    %v1084 = vpop.f32.mrf.mxu0
    %v1085 = vadd.f32 0.0, %v1084
    %1086 = vmatmul.f32.gmra.mxu0 %v130
    %v1087 = vpop.f32.mrf.mxu0
    %v1088 = vadd.f32 0.0, %v1087
    %1089 = vmatmul.f32.gmra.mxu0 %v133
    %v1090 = vpop.f32.mrf.mxu0
    %v1091 = vadd.f32 0.0, %v1090
    %1092 = vmatmul.f32.gmra.mxu0 %v136
    %v1093 = vpop.f32.mrf.mxu0
    %v1094 = vadd.f32 0.0, %v1093
    %1095 = vmatmul.f32.gmra.mxu0 %v139
    %v1096 = vpop.f32.mrf.mxu0
    %v1097 = vadd.f32 0.0, %v1096
    %1098 = vmatmul.f32.gmra.mxu0 %v142
    %v1099 = vpop.f32.mrf.mxu0
    %v1100 = vadd.f32 0.0, %v1099
    %1101 = vmatmul.f32.gmra.mxu0 %v145
    %v1102 = vpop.f32.mrf.mxu0
    %v1103 = vadd.f32 0.0, %v1102
    %1104 = vmatmul.f32.gmra.mxu0 %v148
    %v1105 = vpop.f32.mrf.mxu0
    %v1106 = vadd.f32 0.0, %v1105
    %1107 = vmatmul.f32.gmra.mxu0 %v151
    %v1108 = vpop.f32.mrf.mxu0
    %v1109 = vadd.f32 0.0, %v1108
    %1110 = vmatmul.f32.gmra.mxu0 %v536
    %v1111 = vpop.f32.mrf.mxu0
    %v1112 = vadd.f32 0.0, %v1111
    %1113 = vmatmul.f32.gmra.mxu0 %v781
    %v1114 = vpop.f32.mrf.mxu0
    %v1115 = vadd.f32 0.0, %v1114
    %1116 = vmatmul.f32.gmra.mxu0 %v1026
    %v1117 = vpop.f32.mrf.mxu0
    %v1118 = vadd.f32 0.0, %v1117
    %1119 = vdwg.mxu0
    %s1120 = scalar_lea.vmem %s2, 128
    %v1121 = vld [vmem:[%s1120] sm:$0xff]
    %v1122 = vld [vmem:[%s1120 + $0x8] sm:$0xff]
    %v1123 = vld [vmem:[%s1120 + $0x10] sm:$0xff]
    %v1124 = vld [vmem:[%s1120 + $0x18] sm:$0xf]
    %v1126 = vsel %vm153, %v1124, 0
    %1128 = vmatpush.msra.mxu0 0.0
    %1129 = vmatpush.msra.mxu0 0.0
    %1130 = vmatpush.msra.mxu0 0.0
    %1131 = vmatpush.msra.mxu0 0.0
    %1132 = vmatpush.msra.mxu0 0.0
    %1133 = vmatpush.msra.mxu0 0.0
    %1134 = vmatpush.msra.mxu0 0.0
    %1135 = vmatpush.msra.mxu0 0.0
    %1136 = vmatpush.msra.mxu0 0.0
    %1137 = vmatpush.msra.mxu0 0.0
    %1138 = vmatpush.msra.mxu0 0.0
    %1139 = vmatpush.msra.mxu0 0.0
    %1140 = vmatpush.msra.mxu0 %v1126
    %1141 = vmatpush.msra.mxu0 %v1123
    %1142 = vmatpush.msra.mxu0 %v1122
    %1143 = vmatpush.msra.mxu0 %v1121
    %1144 = vmatmul.f32.gmra.mxu0 %v91
    %v1145 = vpop.f32.mrf.mxu0
    %v1146 = vadd.f32 0.0, %v1145
    %1147 = vmatmul.f32.gmra.mxu0 %v94
    %v1148 = vpop.f32.mrf.mxu0
    %v1149 = vadd.f32 0.0, %v1148
    %1150 = vmatmul.f32.gmra.mxu0 %v97
    %v1151 = vpop.f32.mrf.mxu0
    %v1152 = vadd.f32 0.0, %v1151
    %1153 = vmatmul.f32.gmra.mxu0 %v100
    %v1154 = vpop.f32.mrf.mxu0
    %v1155 = vadd.f32 0.0, %v1154
    %1156 = vmatmul.f32.gmra.mxu0 %v103
    %v1157 = vpop.f32.mrf.mxu0
    %v1158 = vadd.f32 0.0, %v1157
    %1159 = vmatmul.f32.gmra.mxu0 %v106
    %v1160 = vpop.f32.mrf.mxu0
    %v1161 = vadd.f32 0.0, %v1160
    %1162 = vmatmul.f32.gmra.mxu0 %v109
    %v1163 = vpop.f32.mrf.mxu0
    %v1164 = vadd.f32 0.0, %v1163
    %1165 = vmatmul.f32.gmra.mxu0 %v112
    %v1166 = vpop.f32.mrf.mxu0
    %v1167 = vadd.f32 0.0, %v1166
    %1168 = vmatmul.f32.gmra.mxu0 %v115
    %v1169 = vpop.f32.mrf.mxu0
    %v1170 = vadd.f32 0.0, %v1169
    %1171 = vmatmul.f32.gmra.mxu0 %v118
    %v1172 = vpop.f32.mrf.mxu0
    %v1173 = vadd.f32 0.0, %v1172
    %1174 = vmatmul.f32.gmra.mxu0 %v121
    %v1175 = vpop.f32.mrf.mxu0
    %v1176 = vadd.f32 0.0, %v1175
    %1177 = vmatmul.f32.gmra.mxu0 %v124
    %v1178 = vpop.f32.mrf.mxu0
    %v1179 = vadd.f32 0.0, %v1178
    %1180 = vmatmul.f32.gmra.mxu0 %v127
    %v1181 = vpop.f32.mrf.mxu0
    %v1182 = vadd.f32 0.0, %v1181
    %1183 = vmatmul.f32.gmra.mxu0 %v130
    %v1184 = vpop.f32.mrf.mxu0
    %v1185 = vadd.f32 0.0, %v1184
    %1186 = vmatmul.f32.gmra.mxu0 %v133
    %v1187 = vpop.f32.mrf.mxu0
    %v1188 = vadd.f32 0.0, %v1187
    %1189 = vmatmul.f32.gmra.mxu0 %v136
    %v1190 = vpop.f32.mrf.mxu0
    %v1191 = vadd.f32 0.0, %v1190
    %1192 = vmatmul.f32.gmra.mxu0 %v139
    %v1193 = vpop.f32.mrf.mxu0
    %v1194 = vadd.f32 0.0, %v1193
    %1195 = vmatmul.f32.gmra.mxu0 %v142
    %v1196 = vpop.f32.mrf.mxu0
    %v1197 = vadd.f32 0.0, %v1196
    %1198 = vmatmul.f32.gmra.mxu0 %v145
    %v1199 = vpop.f32.mrf.mxu0
    %v1200 = vadd.f32 0.0, %v1199
    %1201 = vmatmul.f32.gmra.mxu0 %v148
    %v1202 = vpop.f32.mrf.mxu0
    %v1203 = vadd.f32 0.0, %v1202
    %1204 = vmatmul.f32.gmra.mxu0 %v151
    %v1205 = vpop.f32.mrf.mxu0
    %v1206 = vadd.f32 0.0, %v1205
    %1207 = vmatmul.f32.gmra.mxu0 %v536
    %v1208 = vpop.f32.mrf.mxu0
    %v1209 = vadd.f32 0.0, %v1208
    %1210 = vmatmul.f32.gmra.mxu0 %v781
    %v1211 = vpop.f32.mrf.mxu0
    %v1212 = vadd.f32 0.0, %v1211
    %1213 = vmatmul.f32.gmra.mxu0 %v1026
    %v1214 = vpop.f32.mrf.mxu0
    %v1215 = vadd.f32 0.0, %v1214
    %1216 = vdwg.mxu0
    %v1217 = vadd.f32 %v972, %v1049
    %v1218 = vadd.f32 %v973, %v1052
    %v1219 = vadd.f32 %v974, %v1055
    %v1220 = vadd.f32 %v975, %v1058
    %v1221 = vadd.f32 %v976, %v1061
    %v1222 = vadd.f32 %v977, %v1064
    %v1223 = vadd.f32 %v978, %v1067
    %v1224 = vadd.f32 %v979, %v1070
    %v1225 = vadd.f32 %v980, %v1073
    %v1226 = vadd.f32 %v981, %v1076
    %v1227 = vadd.f32 %v982, %v1079
    %v1228 = vadd.f32 %v983, %v1082
    %v1229 = vadd.f32 %v984, %v1085
    %v1230 = vadd.f32 %v985, %v1088
    %v1231 = vadd.f32 %v986, %v1091
    %v1232 = vadd.f32 %v987, %v1094
    %v1233 = vadd.f32 %v988, %v1097
    %v1234 = vadd.f32 %v989, %v1100
    %v1235 = vadd.f32 %v990, %v1103
    %v1236 = vadd.f32 %v991, %v1106
    %v1237 = vadd.f32 %v992, %v1109
    %v1238 = vadd.f32 %v993, %v1112
    %v1239 = vadd.f32 %v994, %v1115
    %v1240 = vadd.f32 %v995, %v1118
    %v1241 = vadd.f32 %v996, %v1146
    %v1242 = vadd.f32 %v997, %v1149
    %v1243 = vadd.f32 %v998, %v1152
    %v1244 = vadd.f32 %v999, %v1155
    %v1245 = vadd.f32 %v1000, %v1158
    %v1246 = vadd.f32 %v1001, %v1161
    %v1247 = vadd.f32 %v1002, %v1164
    %v1248 = vadd.f32 %v1003, %v1167
    %v1249 = vadd.f32 %v1004, %v1170
    %v1250 = vadd.f32 %v1005, %v1173
    %v1251 = vadd.f32 %v1006, %v1176
    %v1252 = vadd.f32 %v1007, %v1179
    %v1253 = vadd.f32 %v1008, %v1182
    %v1254 = vadd.f32 %v1009, %v1185
    %v1255 = vadd.f32 %v1010, %v1188
    %v1256 = vadd.f32 %v1011, %v1191
    %v1257 = vadd.f32 %v1012, %v1194
    %v1258 = vadd.f32 %v1013, %v1197
    %v1259 = vadd.f32 %v1014, %v1200
    %v1260 = vadd.f32 %v1015, %v1203
    %v1261 = vadd.f32 %v1016, %v1206
    %v1262 = vadd.f32 %v1017, %v1209
    %v1263 = vadd.f32 %v1018, %v1212
    %v1264 = vadd.f32 %v1019, %v1215
    %v1265 = vld [vmem:[%s3] sm:$0x1]
    %v1267 = vperm.slane %v1265, 0
    %v1269 = vadd.f32 %v1217, %v1267
    %v1270 = vadd.f32 %v1218, %v1267
    %v1271 = vadd.f32 %v1219, %v1267
    %v1272 = vadd.f32 %v1220, %v1267
    %v1273 = vadd.f32 %v1221, %v1267
    %v1274 = vadd.f32 %v1222, %v1267
    %v1275 = vadd.f32 %v1223, %v1267
    %v1276 = vadd.f32 %v1224, %v1267
    %v1277 = vadd.f32 %v1225, %v1267
    %v1278 = vadd.f32 %v1226, %v1267
    %v1279 = vadd.f32 %v1227, %v1267
    %v1280 = vadd.f32 %v1228, %v1267
    %v1281 = vadd.f32 %v1229, %v1267
    %v1282 = vadd.f32 %v1230, %v1267
    %v1283 = vadd.f32 %v1231, %v1267
    %v1284 = vadd.f32 %v1232, %v1267
    %v1285 = vadd.f32 %v1233, %v1267
    %v1286 = vadd.f32 %v1234, %v1267
    %v1287 = vadd.f32 %v1235, %v1267
    %v1288 = vadd.f32 %v1236, %v1267
    %v1289 = vadd.f32 %v1237, %v1267
    %v1290 = vadd.f32 %v1238, %v1267
    %v1291 = vadd.f32 %v1239, %v1267
    %v1292 = vadd.f32 %v1240, %v1267
    %v1293 = vadd.f32 %v1241, %v1267
    %v1294 = vadd.f32 %v1242, %v1267
    %v1295 = vadd.f32 %v1243, %v1267
    %v1296 = vadd.f32 %v1244, %v1267
    %v1297 = vadd.f32 %v1245, %v1267
    %v1298 = vadd.f32 %v1246, %v1267
    %v1299 = vadd.f32 %v1247, %v1267
    %v1300 = vadd.f32 %v1248, %v1267
    %v1301 = vadd.f32 %v1249, %v1267
    %v1302 = vadd.f32 %v1250, %v1267
    %v1303 = vadd.f32 %v1251, %v1267
    %v1304 = vadd.f32 %v1252, %v1267
    %v1305 = vadd.f32 %v1253, %v1267
    %v1306 = vadd.f32 %v1254, %v1267
    %v1307 = vadd.f32 %v1255, %v1267
    %v1308 = vadd.f32 %v1256, %v1267
    %v1309 = vadd.f32 %v1257, %v1267
    %v1310 = vadd.f32 %v1258, %v1267
    %v1311 = vadd.f32 %v1259, %v1267
    %v1312 = vadd.f32 %v1260, %v1267
    %v1313 = vadd.f32 %v1261, %v1267
    %v1314 = vadd.f32 %v1262, %v1267
    %v1315 = vadd.f32 %v1263, %v1267
    %v1316 = vadd.f32 %v1264, %v1267
    %v1317 = vmax.f32 %v1269, %v1293
    %v1318 = vmax.f32 %v1270, %v1294
    %v1319 = vmax.f32 %v1271, %v1295
    %v1320 = vmax.f32 %v1272, %v1296
    %v1321 = vmax.f32 %v1273, %v1297
    %v1322 = vmax.f32 %v1274, %v1298
    %v1323 = vmax.f32 %v1275, %v1299
    %v1324 = vmax.f32 %v1276, %v1300
    %v1325 = vmax.f32 %v1277, %v1301
    %v1326 = vmax.f32 %v1278, %v1302
    %v1327 = vmax.f32 %v1279, %v1303
    %v1328 = vmax.f32 %v1280, %v1304
    %v1329 = vmax.f32 %v1281, %v1305
    %v1330 = vmax.f32 %v1282, %v1306
    %v1331 = vmax.f32 %v1283, %v1307
    %v1332 = vmax.f32 %v1284, %v1308
    %v1333 = vmax.f32 %v1285, %v1309
    %v1334 = vmax.f32 %v1286, %v1310
    %v1335 = vmax.f32 %v1287, %v1311
    %v1336 = vmax.f32 %v1288, %v1312
    %v1337 = vmax.f32 %v1289, %v1313
    %v1338 = vmax.f32 %v1290, %v1314
    %v1339 = vmax.f32 %v1291, %v1315
    %v1340 = vmax.f32 %v1292, %v1316
    %v1341 = vmax.f32 %v1317, %v1318
    %v1342 = vmax.f32 %v1319, %v1320
    %v1343 = vmax.f32 %v1321, %v1322
    %v1344 = vmax.f32 %v1323, %v1324
    %v1345 = vmax.f32 %v1325, %v1326
    %v1346 = vmax.f32 %v1327, %v1328
    %v1347 = vmax.f32 %v1329, %v1330
    %v1348 = vmax.f32 %v1331, %v1332
    %v1349 = vmax.f32 %v1333, %v1334
    %v1350 = vmax.f32 %v1335, %v1336
    %v1351 = vmax.f32 %v1337, %v1338
    %v1352 = vmax.f32 %v1339, %v1340
    %v1353 = vmax.f32 %v1341, 0.0
    %v1354 = vmax.f32 %v1342, 0.0
    %v1355 = vmax.f32 %v1343, 0.0
    %v1356 = vmax.f32 %v1344, 0.0
    %v1357 = vmax.f32 %v1345, 0.0
    %v1358 = vmax.f32 %v1346, 0.0
    %v1359 = vmax.f32 %v1347, 0.0
    %v1360 = vmax.f32 %v1348, 0.0
    %v1361 = vmax.f32 %v1349, 0.0
    %v1362 = vmax.f32 %v1350, 0.0
    %v1363 = vmax.f32 %v1351, 0.0
    %v1364 = vmax.f32 %v1352, 0.0
    %v1365 = vld [vmem:[%s4] sm:$0xff]
    %v1366 = vld [vmem:[%s4 + $0x8] sm:$0xff]
    %v1367 = vld [vmem:[%s4 + $0x10] sm:$0xff]
    %v1368 = vld [vmem:[%s4 + $0x18] sm:$0xff]
    %v1369 = vld [vmem:[%s4 + $0x20] sm:$0xff]
    %v1370 = vld [vmem:[%s4 + $0x28] sm:$0xff]
    %v1371 = vld [vmem:[%s4 + $0x30] sm:$0xff]
    %v1372 = vld [vmem:[%s4 + $0x38] sm:$0xff]
    %v1373 = vld [vmem:[%s4 + $0x40] sm:$0xff]
    %v1374 = vld [vmem:[%s4 + $0x48] sm:$0xff]
    %v1375 = vld [vmem:[%s4 + $0x50] sm:$0xff]
    %v1376 = vld [vmem:[%s4 + $0x58] sm:$0xff]
    %v1377 = vld [vmem:[%s4 + $0x60] sm:$0xff]
    %v1378 = vld [vmem:[%s4 + $0x68] sm:$0xff]
    %v1379 = vld [vmem:[%s4 + $0x70] sm:$0xff]
    %v1380 = vld [vmem:[%s5] sm:$0xff]
    %v1381 = vld [vmem:[%s5 + $0x8] sm:$0xff]
    %v1382 = vld [vmem:[%s5 + $0x10] sm:$0xff]
    %v1383 = vld [vmem:[%s5 + $0x18] sm:$0xff]
    %v1384 = vld [vmem:[%s5 + $0x20] sm:$0xff]
    %v1385 = vld [vmem:[%s5 + $0x28] sm:$0xff]
    %v1386 = vld [vmem:[%s5 + $0x30] sm:$0xff]
    %v1387 = vld [vmem:[%s5 + $0x38] sm:$0xff]
    %v1388 = vld [vmem:[%s5 + $0x40] sm:$0xff]
    %v1389 = vld [vmem:[%s5 + $0x48] sm:$0xff]
    %v1390 = vld [vmem:[%s5 + $0x50] sm:$0xff]
    %v1391 = vld [vmem:[%s5 + $0x58] sm:$0xff]
    %v1392 = vld [vmem:[%s5 + $0x60] sm:$0xff]
    %v1393 = vld [vmem:[%s5 + $0x68] sm:$0xff]
    %v1394 = vld [vmem:[%s5 + $0x70] sm:$0xff]
    %s1395 = scalar_lea.vmem %s4, 120
    %v1396 = vld [vmem:[%s1395] sm:$0xff]
    %v1397 = vld [vmem:[%s1395 + $0x8] sm:$0xff]
    %v1398 = vld [vmem:[%s1395 + $0x10] sm:$0xff]
    %v1399 = vld [vmem:[%s1395 + $0x18] sm:$0xff]
    %v1400 = vld [vmem:[%s1395 + $0x20] sm:$0xff]
    %v1401 = vld [vmem:[%s1395 + $0x28] sm:$0xff]
    %v1402 = vld [vmem:[%s1395 + $0x30] sm:$0xff]
    %v1403 = vld [vmem:[%s1395 + $0x38] sm:$0xff]
    %v1404 = vld [vmem:[%s1395 + $0x40] sm:$0xff]
    %v1405 = vld [vmem:[%s1395 + $0x48] sm:$0xff]
    %v1406 = vld [vmem:[%s1395 + $0x50] sm:$0xff]
    %v1407 = vld [vmem:[%s1395 + $0x58] sm:$0xff]
    %v1408 = vld [vmem:[%s1395 + $0x60] sm:$0xff]
    %v1409 = vld [vmem:[%s1395 + $0x68] sm:$0xff]
    %v1410 = vld [vmem:[%s1395 + $0x70] sm:$0xff]
    %vm1411 = vcmask 982016
    %v1413 = vsel %vm1411, %v1354, 0
    %v1416 = vsel %vm1411, %v1355, 0
    %v1419 = vsel %vm1411, %v1356, 0
    %v1422 = vsel %vm1411, %v1357, 0
    %v1425 = vsel %vm1411, %v1358, 0
    %v1428 = vsel %vm1411, %v1359, 0
    %v1431 = vsel %vm1411, %v1360, 0
    %v1434 = vsel %vm1411, %v1361, 0
    %1436 = vmatpush.msra.mxu0 0.0
    %1437 = vmatpush.msra.mxu0 %v1410
    %1438 = vmatpush.msra.mxu0 %v1409
    %1439 = vmatpush.msra.mxu0 %v1408
    %1440 = vmatpush.msra.mxu0 %v1407
    %1441 = vmatpush.msra.mxu0 %v1406
    %1442 = vmatpush.msra.mxu0 %v1405
    %1443 = vmatpush.msra.mxu0 %v1404
    %1444 = vmatpush.msra.mxu0 %v1403
    %1445 = vmatpush.msra.mxu0 %v1402
    %1446 = vmatpush.msra.mxu0 %v1401
    %1447 = vmatpush.msra.mxu0 %v1400
    %1448 = vmatpush.msra.mxu0 %v1399
    %1449 = vmatpush.msra.mxu0 %v1398
    %1450 = vmatpush.msra.mxu0 %v1397
    %1451 = vmatpush.msra.mxu0 %v1396
    %1452 = vmatmul.f32.gmra.mxu0 %v1413
    %v1453 = vpop.f32.mrf.mxu0
    %v1454 = vadd.f32 0.0, %v1453
    %1455 = vmatmul.f32.gmra.mxu0 %v1416
    %v1456 = vpop.f32.mrf.mxu0
    %v1457 = vadd.f32 0.0, %v1456
    %1458 = vmatmul.f32.gmra.mxu0 %v1419
    %v1459 = vpop.f32.mrf.mxu0
    %v1460 = vadd.f32 0.0, %v1459
    %1461 = vmatmul.f32.gmra.mxu0 %v1422
    %v1462 = vpop.f32.mrf.mxu0
    %v1463 = vadd.f32 0.0, %v1462
    %1464 = vmatmul.f32.gmra.mxu0 %v1425
    %v1465 = vpop.f32.mrf.mxu0
    %v1466 = vadd.f32 0.0, %v1465
    %1467 = vmatmul.f32.gmra.mxu0 %v1428
    %v1468 = vpop.f32.mrf.mxu0
    %v1469 = vadd.f32 0.0, %v1468
    %1470 = vmatmul.f32.gmra.mxu0 %v1431
    %v1471 = vpop.f32.mrf.mxu0
    %v1472 = vadd.f32 0.0, %v1471
    %1473 = vmatmul.f32.gmra.mxu0 %v1434
    %v1474 = vpop.f32.mrf.mxu0
    %v1475 = vadd.f32 0.0, %v1474
    %1476 = vdwg.mxu0
    %s1477 = scalar_lea.vmem %s5, 120
    %v1478 = vld [vmem:[%s1477] sm:$0xff]
    %v1479 = vld [vmem:[%s1477 + $0x8] sm:$0xff]
    %v1480 = vld [vmem:[%s1477 + $0x10] sm:$0xff]
    %v1481 = vld [vmem:[%s1477 + $0x18] sm:$0xff]
    %v1482 = vld [vmem:[%s1477 + $0x20] sm:$0xff]
    %v1483 = vld [vmem:[%s1477 + $0x28] sm:$0xff]
    %v1484 = vld [vmem:[%s1477 + $0x30] sm:$0xff]
    %v1485 = vld [vmem:[%s1477 + $0x38] sm:$0xff]
    %v1486 = vld [vmem:[%s1477 + $0x40] sm:$0xff]
    %v1487 = vld [vmem:[%s1477 + $0x48] sm:$0xff]
    %v1488 = vld [vmem:[%s1477 + $0x50] sm:$0xff]
    %v1489 = vld [vmem:[%s1477 + $0x58] sm:$0xff]
    %v1490 = vld [vmem:[%s1477 + $0x60] sm:$0xff]
    %v1491 = vld [vmem:[%s1477 + $0x68] sm:$0xff]
    %v1492 = vld [vmem:[%s1477 + $0x70] sm:$0xff]
    %1493 = vmatpush.msra.mxu0 0.0
    %1494 = vmatpush.msra.mxu0 %v1492
    %1495 = vmatpush.msra.mxu0 %v1491
    %1496 = vmatpush.msra.mxu0 %v1490
    %1497 = vmatpush.msra.mxu0 %v1489
    %1498 = vmatpush.msra.mxu0 %v1488
    %1499 = vmatpush.msra.mxu0 %v1487
    %1500 = vmatpush.msra.mxu0 %v1486
    %1501 = vmatpush.msra.mxu0 %v1485
    %1502 = vmatpush.msra.mxu0 %v1484
    %1503 = vmatpush.msra.mxu0 %v1483
    %1504 = vmatpush.msra.mxu0 %v1482
    %1505 = vmatpush.msra.mxu0 %v1481
    %1506 = vmatpush.msra.mxu0 %v1480
    %1507 = vmatpush.msra.mxu0 %v1479
    %1508 = vmatpush.msra.mxu0 %v1478
    %1509 = vmatmul.f32.gmra.mxu0 %v1413
    %v1510 = vpop.f32.mrf.mxu0
    %v1511 = vadd.f32 0.0, %v1510
    %1512 = vmatmul.f32.gmra.mxu0 %v1416
    %v1513 = vpop.f32.mrf.mxu0
    %v1514 = vadd.f32 0.0, %v1513
    %1515 = vmatmul.f32.gmra.mxu0 %v1419
    %v1516 = vpop.f32.mrf.mxu0
    %v1517 = vadd.f32 0.0, %v1516
    %1518 = vmatmul.f32.gmra.mxu0 %v1422
    %v1519 = vpop.f32.mrf.mxu0
    %v1520 = vadd.f32 0.0, %v1519
    %1521 = vmatmul.f32.gmra.mxu0 %v1425
    %v1522 = vpop.f32.mrf.mxu0
    %v1523 = vadd.f32 0.0, %v1522
    %1524 = vmatmul.f32.gmra.mxu0 %v1428
    %v1525 = vpop.f32.mrf.mxu0
    %v1526 = vadd.f32 0.0, %v1525
    %1527 = vmatmul.f32.gmra.mxu0 %v1431
    %v1528 = vpop.f32.mrf.mxu0
    %v1529 = vadd.f32 0.0, %v1528
    %1530 = vmatmul.f32.gmra.mxu0 %v1434
    %v1531 = vpop.f32.mrf.mxu0
    %v1532 = vadd.f32 0.0, %v1531
    %1533 = vdwg.mxu0
    %v1535 = vsel %vm1411, %v1353, 0
    %1537 = vmatpush.msra.mxu0 0.0
    %1538 = vmatpush.msra.mxu0 %v1379
    %1539 = vmatpush.msra.mxu0 %v1378
    %1540 = vmatpush.msra.mxu0 %v1377
    %1541 = vmatpush.msra.mxu0 %v1376
    %1542 = vmatpush.msra.mxu0 %v1375
    %1543 = vmatpush.msra.mxu0 %v1374
    %1544 = vmatpush.msra.mxu0 %v1373
    %1545 = vmatpush.msra.mxu0 %v1372
    %1546 = vmatpush.msra.mxu0 %v1371
    %1547 = vmatpush.msra.mxu0 %v1370
    %1548 = vmatpush.msra.mxu0 %v1369
    %1549 = vmatpush.msra.mxu0 %v1368
    %1550 = vmatpush.msra.mxu0 %v1367
    %1551 = vmatpush.msra.mxu0 %v1366
    %1552 = vmatpush.msra.mxu0 %v1365
    %1553 = vmatmul.f32.gmra.mxu0 %v1535
    %v1554 = vpop.f32.mrf.mxu0
    %v1555 = vadd.f32 %v1454, %v1554
    %1556 = vmatmul.f32.gmra.mxu0 %v1413
    %v1557 = vpop.f32.mrf.mxu0
    %v1558 = vadd.f32 %v1457, %v1557
    %1559 = vmatmul.f32.gmra.mxu0 %v1416
    %v1560 = vpop.f32.mrf.mxu0
    %v1561 = vadd.f32 %v1460, %v1560
    %1562 = vmatmul.f32.gmra.mxu0 %v1419
    %v1563 = vpop.f32.mrf.mxu0
    %v1564 = vadd.f32 %v1463, %v1563
    %1565 = vmatmul.f32.gmra.mxu0 %v1422
    %v1566 = vpop.f32.mrf.mxu0
    %v1567 = vadd.f32 %v1466, %v1566
    %1568 = vmatmul.f32.gmra.mxu0 %v1425
    %v1569 = vpop.f32.mrf.mxu0
    %v1570 = vadd.f32 %v1469, %v1569
    %1571 = vmatmul.f32.gmra.mxu0 %v1428
    %v1572 = vpop.f32.mrf.mxu0
    %v1573 = vadd.f32 %v1472, %v1572
    %1574 = vmatmul.f32.gmra.mxu0 %v1431
    %v1575 = vpop.f32.mrf.mxu0
    %v1576 = vadd.f32 %v1475, %v1575
    %1577 = vdwg.mxu0
    %1578 = vmatpush.msra.mxu0 0.0
    %1579 = vmatpush.msra.mxu0 %v1394
    %1580 = vmatpush.msra.mxu0 %v1393
    %1581 = vmatpush.msra.mxu0 %v1392
    %1582 = vmatpush.msra.mxu0 %v1391
    %1583 = vmatpush.msra.mxu0 %v1390
    %1584 = vmatpush.msra.mxu0 %v1389
    %1585 = vmatpush.msra.mxu0 %v1388
    %1586 = vmatpush.msra.mxu0 %v1387
    %1587 = vmatpush.msra.mxu0 %v1386
    %1588 = vmatpush.msra.mxu0 %v1385
    %1589 = vmatpush.msra.mxu0 %v1384
    %1590 = vmatpush.msra.mxu0 %v1383
    %1591 = vmatpush.msra.mxu0 %v1382
    %1592 = vmatpush.msra.mxu0 %v1381
    %1593 = vmatpush.msra.mxu0 %v1380
    %1594 = vmatmul.f32.gmra.mxu0 %v1535
    %v1595 = vpop.f32.mrf.mxu0
    %v1596 = vadd.f32 %v1511, %v1595
    %1597 = vmatmul.f32.gmra.mxu0 %v1413
    %v1598 = vpop.f32.mrf.mxu0
    %v1599 = vadd.f32 %v1514, %v1598
    %1600 = vmatmul.f32.gmra.mxu0 %v1416
    %v1601 = vpop.f32.mrf.mxu0
    %v1602 = vadd.f32 %v1517, %v1601
    %1603 = vmatmul.f32.gmra.mxu0 %v1419
    %v1604 = vpop.f32.mrf.mxu0
    %v1605 = vadd.f32 %v1520, %v1604
    %1606 = vmatmul.f32.gmra.mxu0 %v1422
    %v1607 = vpop.f32.mrf.mxu0
    %v1608 = vadd.f32 %v1523, %v1607
    %1609 = vmatmul.f32.gmra.mxu0 %v1425
    %v1610 = vpop.f32.mrf.mxu0
    %v1611 = vadd.f32 %v1526, %v1610
    %1612 = vmatmul.f32.gmra.mxu0 %v1428
    %v1613 = vpop.f32.mrf.mxu0
    %v1614 = vadd.f32 %v1529, %v1613
    %1615 = vmatmul.f32.gmra.mxu0 %v1431
    %v1616 = vpop.f32.mrf.mxu0
    %v1617 = vadd.f32 %v1532, %v1616
    %1618 = vdwg.mxu0
    %s1619 = scalar_lea.vmem %s4, 240
    %v1620 = vld [vmem:[%s1619] sm:$0xff]
    %v1621 = vld [vmem:[%s1619 + $0x8] sm:$0xff]
    %v1622 = vld [vmem:[%s1619 + $0x10] sm:$0xff]
    %v1623 = vld [vmem:[%s1619 + $0x18] sm:$0xff]
    %v1624 = vld [vmem:[%s1619 + $0x20] sm:$0xff]
    %v1625 = vld [vmem:[%s1619 + $0x28] sm:$0xff]
    %v1626 = vld [vmem:[%s1619 + $0x30] sm:$0xff]
    %v1627 = vld [vmem:[%s1619 + $0x38] sm:$0xff]
    %v1628 = vld [vmem:[%s1619 + $0x40] sm:$0xff]
    %v1629 = vld [vmem:[%s1619 + $0x48] sm:$0xff]
    %v1630 = vld [vmem:[%s1619 + $0x50] sm:$0xff]
    %v1631 = vld [vmem:[%s1619 + $0x58] sm:$0xff]
    %v1632 = vld [vmem:[%s1619 + $0x60] sm:$0xff]
    %v1633 = vld [vmem:[%s1619 + $0x68] sm:$0xff]
    %v1634 = vld [vmem:[%s1619 + $0x70] sm:$0xff]
    %v1636 = vsel %vm1411, %v1362, 0
    %1638 = vmatpush.msra.mxu0 0.0
    %1639 = vmatpush.msra.mxu0 %v1634
    %1640 = vmatpush.msra.mxu0 %v1633
    %1641 = vmatpush.msra.mxu0 %v1632
    %1642 = vmatpush.msra.mxu0 %v1631
    %1643 = vmatpush.msra.mxu0 %v1630
    %1644 = vmatpush.msra.mxu0 %v1629
    %1645 = vmatpush.msra.mxu0 %v1628
    %1646 = vmatpush.msra.mxu0 %v1627
    %1647 = vmatpush.msra.mxu0 %v1626
    %1648 = vmatpush.msra.mxu0 %v1625
    %1649 = vmatpush.msra.mxu0 %v1624
    %1650 = vmatpush.msra.mxu0 %v1623
    %1651 = vmatpush.msra.mxu0 %v1622
    %1652 = vmatpush.msra.mxu0 %v1621
    %1653 = vmatpush.msra.mxu0 %v1620
    %1654 = vmatmul.f32.gmra.mxu0 %v1416
    %v1655 = vpop.f32.mrf.mxu0
    %v1656 = vadd.f32 0.0, %v1655
    %1657 = vmatmul.f32.gmra.mxu0 %v1419
    %v1658 = vpop.f32.mrf.mxu0
    %v1659 = vadd.f32 0.0, %v1658
    %1660 = vmatmul.f32.gmra.mxu0 %v1422
    %v1661 = vpop.f32.mrf.mxu0
    %v1662 = vadd.f32 0.0, %v1661
    %1663 = vmatmul.f32.gmra.mxu0 %v1425
    %v1664 = vpop.f32.mrf.mxu0
    %v1665 = vadd.f32 0.0, %v1664
    %1666 = vmatmul.f32.gmra.mxu0 %v1428
    %v1667 = vpop.f32.mrf.mxu0
    %v1668 = vadd.f32 0.0, %v1667
    %1669 = vmatmul.f32.gmra.mxu0 %v1431
    %v1670 = vpop.f32.mrf.mxu0
    %v1671 = vadd.f32 0.0, %v1670
    %1672 = vmatmul.f32.gmra.mxu0 %v1434
    %v1673 = vpop.f32.mrf.mxu0
    %v1674 = vadd.f32 0.0, %v1673
    %1675 = vmatmul.f32.gmra.mxu0 %v1636
    %v1676 = vpop.f32.mrf.mxu0
    %v1677 = vadd.f32 0.0, %v1676
    %1678 = vdwg.mxu0
    %s1679 = scalar_lea.vmem %s5, 240
    %v1680 = vld [vmem:[%s1679] sm:$0xff]
    %v1681 = vld [vmem:[%s1679 + $0x8] sm:$0xff]
    %v1682 = vld [vmem:[%s1679 + $0x10] sm:$0xff]
    %v1683 = vld [vmem:[%s1679 + $0x18] sm:$0xff]
    %v1684 = vld [vmem:[%s1679 + $0x20] sm:$0xff]
    %v1685 = vld [vmem:[%s1679 + $0x28] sm:$0xff]
    %v1686 = vld [vmem:[%s1679 + $0x30] sm:$0xff]
    %v1687 = vld [vmem:[%s1679 + $0x38] sm:$0xff]
    %v1688 = vld [vmem:[%s1679 + $0x40] sm:$0xff]
    %v1689 = vld [vmem:[%s1679 + $0x48] sm:$0xff]
    %v1690 = vld [vmem:[%s1679 + $0x50] sm:$0xff]
    %v1691 = vld [vmem:[%s1679 + $0x58] sm:$0xff]
    %v1692 = vld [vmem:[%s1679 + $0x60] sm:$0xff]
    %v1693 = vld [vmem:[%s1679 + $0x68] sm:$0xff]
    %v1694 = vld [vmem:[%s1679 + $0x70] sm:$0xff]
    %1695 = vmatpush.msra.mxu0 0.0
    %1696 = vmatpush.msra.mxu0 %v1694
    %1697 = vmatpush.msra.mxu0 %v1693
    %1698 = vmatpush.msra.mxu0 %v1692
    %1699 = vmatpush.msra.mxu0 %v1691
    %1700 = vmatpush.msra.mxu0 %v1690
    %1701 = vmatpush.msra.mxu0 %v1689
    %1702 = vmatpush.msra.mxu0 %v1688
    %1703 = vmatpush.msra.mxu0 %v1687
    %1704 = vmatpush.msra.mxu0 %v1686
    %1705 = vmatpush.msra.mxu0 %v1685
    %1706 = vmatpush.msra.mxu0 %v1684
    %1707 = vmatpush.msra.mxu0 %v1683
    %1708 = vmatpush.msra.mxu0 %v1682
    %1709 = vmatpush.msra.mxu0 %v1681
    %1710 = vmatpush.msra.mxu0 %v1680
    %1711 = vmatmul.f32.gmra.mxu0 %v1416
    %v1712 = vpop.f32.mrf.mxu0
    %v1713 = vadd.f32 0.0, %v1712
    %1714 = vmatmul.f32.gmra.mxu0 %v1419
    %v1715 = vpop.f32.mrf.mxu0
    %v1716 = vadd.f32 0.0, %v1715
    %1717 = vmatmul.f32.gmra.mxu0 %v1422
    %v1718 = vpop.f32.mrf.mxu0
    %v1719 = vadd.f32 0.0, %v1718
    %1720 = vmatmul.f32.gmra.mxu0 %v1425
    %v1721 = vpop.f32.mrf.mxu0
    %v1722 = vadd.f32 0.0, %v1721
    %1723 = vmatmul.f32.gmra.mxu0 %v1428
    %v1724 = vpop.f32.mrf.mxu0
    %v1725 = vadd.f32 0.0, %v1724
    %1726 = vmatmul.f32.gmra.mxu0 %v1431
    %v1727 = vpop.f32.mrf.mxu0
    %v1728 = vadd.f32 0.0, %v1727
    %1729 = vmatmul.f32.gmra.mxu0 %v1434
    %v1730 = vpop.f32.mrf.mxu0
    %v1731 = vadd.f32 0.0, %v1730
    %1732 = vmatmul.f32.gmra.mxu0 %v1636
    %v1733 = vpop.f32.mrf.mxu0
    %v1734 = vadd.f32 0.0, %v1733
    %1735 = vdwg.mxu0
    %v1736 = vadd.f32 %v1555, %v1656
    %v1737 = vadd.f32 %v1558, %v1659
    %v1738 = vadd.f32 %v1561, %v1662
    %v1739 = vadd.f32 %v1564, %v1665
    %v1740 = vadd.f32 %v1567, %v1668
    %v1741 = vadd.f32 %v1570, %v1671
    %v1742 = vadd.f32 %v1573, %v1674
    %v1743 = vadd.f32 %v1576, %v1677
    %v1744 = vadd.f32 %v1596, %v1713
    %v1745 = vadd.f32 %v1599, %v1716
    %v1746 = vadd.f32 %v1602, %v1719
    %v1747 = vadd.f32 %v1605, %v1722
    %v1748 = vadd.f32 %v1608, %v1725
    %v1749 = vadd.f32 %v1611, %v1728
    %v1750 = vadd.f32 %v1614, %v1731
    %v1751 = vadd.f32 %v1617, %v1734
    %s1752 = scalar_lea.vmem %s4, 360
    %v1753 = vld [vmem:[%s1752] sm:$0xff]
    %v1754 = vld [vmem:[%s1752 + $0x8] sm:$0xff]
    %v1755 = vld [vmem:[%s1752 + $0x10] sm:$0xff]
    %v1756 = vld [vmem:[%s1752 + $0x18] sm:$0xff]
    %v1757 = vld [vmem:[%s1752 + $0x20] sm:$0xff]
    %v1758 = vld [vmem:[%s1752 + $0x28] sm:$0xff]
    %v1759 = vld [vmem:[%s1752 + $0x30] sm:$0xff]
    %v1760 = vld [vmem:[%s1752 + $0x38] sm:$0xff]
    %v1761 = vld [vmem:[%s1752 + $0x40] sm:$0xff]
    %v1762 = vld [vmem:[%s1752 + $0x48] sm:$0xff]
    %v1763 = vld [vmem:[%s1752 + $0x50] sm:$0xff]
    %v1764 = vld [vmem:[%s1752 + $0x58] sm:$0xff]
    %v1765 = vld [vmem:[%s1752 + $0x60] sm:$0xff]
    %v1766 = vld [vmem:[%s1752 + $0x68] sm:$0xff]
    %v1767 = vld [vmem:[%s1752 + $0x70] sm:$0xff]
    %v1769 = vsel %vm1411, %v1363, 0
    %1771 = vmatpush.msra.mxu0 0.0
    %1772 = vmatpush.msra.mxu0 %v1767
    %1773 = vmatpush.msra.mxu0 %v1766
    %1774 = vmatpush.msra.mxu0 %v1765
    %1775 = vmatpush.msra.mxu0 %v1764
    %1776 = vmatpush.msra.mxu0 %v1763
    %1777 = vmatpush.msra.mxu0 %v1762
    %1778 = vmatpush.msra.mxu0 %v1761
    %1779 = vmatpush.msra.mxu0 %v1760
    %1780 = vmatpush.msra.mxu0 %v1759
    %1781 = vmatpush.msra.mxu0 %v1758
    %1782 = vmatpush.msra.mxu0 %v1757
    %1783 = vmatpush.msra.mxu0 %v1756
    %1784 = vmatpush.msra.mxu0 %v1755
    %1785 = vmatpush.msra.mxu0 %v1754
    %1786 = vmatpush.msra.mxu0 %v1753
    %1787 = vmatmul.f32.gmra.mxu0 %v1419
    %v1788 = vpop.f32.mrf.mxu0
    %v1789 = vadd.f32 0.0, %v1788
    %1790 = vmatmul.f32.gmra.mxu0 %v1422
    %v1791 = vpop.f32.mrf.mxu0
    %v1792 = vadd.f32 0.0, %v1791
    %1793 = vmatmul.f32.gmra.mxu0 %v1425
    %v1794 = vpop.f32.mrf.mxu0
    %v1795 = vadd.f32 0.0, %v1794
    %1796 = vmatmul.f32.gmra.mxu0 %v1428
    %v1797 = vpop.f32.mrf.mxu0
    %v1798 = vadd.f32 0.0, %v1797
    %1799 = vmatmul.f32.gmra.mxu0 %v1431
    %v1800 = vpop.f32.mrf.mxu0
    %v1801 = vadd.f32 0.0, %v1800
    %1802 = vmatmul.f32.gmra.mxu0 %v1434
    %v1803 = vpop.f32.mrf.mxu0
    %v1804 = vadd.f32 0.0, %v1803
    %1805 = vmatmul.f32.gmra.mxu0 %v1636
    %v1806 = vpop.f32.mrf.mxu0
    %v1807 = vadd.f32 0.0, %v1806
    %1808 = vmatmul.f32.gmra.mxu0 %v1769
    %v1809 = vpop.f32.mrf.mxu0
    %v1810 = vadd.f32 0.0, %v1809
    %1811 = vdwg.mxu0
    %s1812 = scalar_lea.vmem %s5, 360
    %v1813 = vld [vmem:[%s1812] sm:$0xff]
    %v1814 = vld [vmem:[%s1812 + $0x8] sm:$0xff]
    %v1815 = vld [vmem:[%s1812 + $0x10] sm:$0xff]
    %v1816 = vld [vmem:[%s1812 + $0x18] sm:$0xff]
    %v1817 = vld [vmem:[%s1812 + $0x20] sm:$0xff]
    %v1818 = vld [vmem:[%s1812 + $0x28] sm:$0xff]
    %v1819 = vld [vmem:[%s1812 + $0x30] sm:$0xff]
    %v1820 = vld [vmem:[%s1812 + $0x38] sm:$0xff]
    %v1821 = vld [vmem:[%s1812 + $0x40] sm:$0xff]
    %v1822 = vld [vmem:[%s1812 + $0x48] sm:$0xff]
    %v1823 = vld [vmem:[%s1812 + $0x50] sm:$0xff]
    %v1824 = vld [vmem:[%s1812 + $0x58] sm:$0xff]
    %v1825 = vld [vmem:[%s1812 + $0x60] sm:$0xff]
    %v1826 = vld [vmem:[%s1812 + $0x68] sm:$0xff]
    %v1827 = vld [vmem:[%s1812 + $0x70] sm:$0xff]
    %1828 = vmatpush.msra.mxu0 0.0
    %1829 = vmatpush.msra.mxu0 %v1827
    %1830 = vmatpush.msra.mxu0 %v1826
    %1831 = vmatpush.msra.mxu0 %v1825
    %1832 = vmatpush.msra.mxu0 %v1824
    %1833 = vmatpush.msra.mxu0 %v1823
    %1834 = vmatpush.msra.mxu0 %v1822
    %1835 = vmatpush.msra.mxu0 %v1821
    %1836 = vmatpush.msra.mxu0 %v1820
    %1837 = vmatpush.msra.mxu0 %v1819
    %1838 = vmatpush.msra.mxu0 %v1818
    %1839 = vmatpush.msra.mxu0 %v1817
    %1840 = vmatpush.msra.mxu0 %v1816
    %1841 = vmatpush.msra.mxu0 %v1815
    %1842 = vmatpush.msra.mxu0 %v1814
    %1843 = vmatpush.msra.mxu0 %v1813
    %1844 = vmatmul.f32.gmra.mxu0 %v1419
    %v1845 = vpop.f32.mrf.mxu0
    %v1846 = vadd.f32 0.0, %v1845
    %1847 = vmatmul.f32.gmra.mxu0 %v1422
    %v1848 = vpop.f32.mrf.mxu0
    %v1849 = vadd.f32 0.0, %v1848
    %1850 = vmatmul.f32.gmra.mxu0 %v1425
    %v1851 = vpop.f32.mrf.mxu0
    %v1852 = vadd.f32 0.0, %v1851
    %1853 = vmatmul.f32.gmra.mxu0 %v1428
    %v1854 = vpop.f32.mrf.mxu0
    %v1855 = vadd.f32 0.0, %v1854
    %1856 = vmatmul.f32.gmra.mxu0 %v1431
    %v1857 = vpop.f32.mrf.mxu0
    %v1858 = vadd.f32 0.0, %v1857
    %1859 = vmatmul.f32.gmra.mxu0 %v1434
    %v1860 = vpop.f32.mrf.mxu0
    %v1861 = vadd.f32 0.0, %v1860
    %1862 = vmatmul.f32.gmra.mxu0 %v1636
    %v1863 = vpop.f32.mrf.mxu0
    %v1864 = vadd.f32 0.0, %v1863
    %1865 = vmatmul.f32.gmra.mxu0 %v1769
    %v1866 = vpop.f32.mrf.mxu0
    %v1867 = vadd.f32 0.0, %v1866
    %1868 = vdwg.mxu0
    %v1869 = vadd.f32 %v1736, %v1789
    %v1870 = vadd.f32 %v1737, %v1792
    %v1871 = vadd.f32 %v1738, %v1795
    %v1872 = vadd.f32 %v1739, %v1798
    %v1873 = vadd.f32 %v1740, %v1801
    %v1874 = vadd.f32 %v1741, %v1804
    %v1875 = vadd.f32 %v1742, %v1807
    %v1876 = vadd.f32 %v1743, %v1810
    %v1877 = vadd.f32 %v1744, %v1846
    %v1878 = vadd.f32 %v1745, %v1849
    %v1879 = vadd.f32 %v1746, %v1852
    %v1880 = vadd.f32 %v1747, %v1855
    %v1881 = vadd.f32 %v1748, %v1858
    %v1882 = vadd.f32 %v1749, %v1861
    %v1883 = vadd.f32 %v1750, %v1864
    %v1884 = vadd.f32 %v1751, %v1867
    %s1885 = scalar_lea.vmem %s4, 480
    %v1886 = vld [vmem:[%s1885] sm:$0xff]
    %v1887 = vld [vmem:[%s1885 + $0x8] sm:$0xff]
    %v1888 = vld [vmem:[%s1885 + $0x10] sm:$0xff]
    %v1889 = vld [vmem:[%s1885 + $0x18] sm:$0xff]
    %v1890 = vld [vmem:[%s1885 + $0x20] sm:$0xff]
    %v1891 = vld [vmem:[%s1885 + $0x28] sm:$0xff]
    %v1892 = vld [vmem:[%s1885 + $0x30] sm:$0xff]
    %v1893 = vld [vmem:[%s1885 + $0x38] sm:$0xff]
    %v1894 = vld [vmem:[%s1885 + $0x40] sm:$0xff]
    %v1895 = vld [vmem:[%s1885 + $0x48] sm:$0xff]
    %v1896 = vld [vmem:[%s1885 + $0x50] sm:$0xff]
    %v1897 = vld [vmem:[%s1885 + $0x58] sm:$0xff]
    %v1898 = vld [vmem:[%s1885 + $0x60] sm:$0xff]
    %v1899 = vld [vmem:[%s1885 + $0x68] sm:$0xff]
    %v1900 = vld [vmem:[%s1885 + $0x70] sm:$0xff]
    %v1902 = vsel %vm1411, %v1364, 0
    %1904 = vmatpush.msra.mxu0 0.0
    %1905 = vmatpush.msra.mxu0 %v1900
    %1906 = vmatpush.msra.mxu0 %v1899
    %1907 = vmatpush.msra.mxu0 %v1898
    %1908 = vmatpush.msra.mxu0 %v1897
    %1909 = vmatpush.msra.mxu0 %v1896
    %1910 = vmatpush.msra.mxu0 %v1895
    %1911 = vmatpush.msra.mxu0 %v1894
    %1912 = vmatpush.msra.mxu0 %v1893
    %1913 = vmatpush.msra.mxu0 %v1892
    %1914 = vmatpush.msra.mxu0 %v1891
    %1915 = vmatpush.msra.mxu0 %v1890
    %1916 = vmatpush.msra.mxu0 %v1889
    %1917 = vmatpush.msra.mxu0 %v1888
    %1918 = vmatpush.msra.mxu0 %v1887
    %1919 = vmatpush.msra.mxu0 %v1886
    %1920 = vmatmul.f32.gmra.mxu0 %v1422
    %v1921 = vpop.f32.mrf.mxu0
    %v1922 = vadd.f32 0.0, %v1921
    %1923 = vmatmul.f32.gmra.mxu0 %v1425
    %v1924 = vpop.f32.mrf.mxu0
    %v1925 = vadd.f32 0.0, %v1924
    %1926 = vmatmul.f32.gmra.mxu0 %v1428
    %v1927 = vpop.f32.mrf.mxu0
    %v1928 = vadd.f32 0.0, %v1927
    %1929 = vmatmul.f32.gmra.mxu0 %v1431
    %v1930 = vpop.f32.mrf.mxu0
    %v1931 = vadd.f32 0.0, %v1930
    %1932 = vmatmul.f32.gmra.mxu0 %v1434
    %v1933 = vpop.f32.mrf.mxu0
    %v1934 = vadd.f32 0.0, %v1933
    %1935 = vmatmul.f32.gmra.mxu0 %v1636
    %v1936 = vpop.f32.mrf.mxu0
    %v1937 = vadd.f32 0.0, %v1936
    %1938 = vmatmul.f32.gmra.mxu0 %v1769
    %v1939 = vpop.f32.mrf.mxu0
    %v1940 = vadd.f32 0.0, %v1939
    %1941 = vmatmul.f32.gmra.mxu0 %v1902
    %v1942 = vpop.f32.mrf.mxu0
    %v1943 = vadd.f32 0.0, %v1942
    %1944 = vdwg.mxu0
    %s1945 = scalar_lea.vmem %s5, 480
    %v1946 = vld [vmem:[%s1945] sm:$0xff]
    %v1947 = vld [vmem:[%s1945 + $0x8] sm:$0xff]
    %v1948 = vld [vmem:[%s1945 + $0x10] sm:$0xff]
    %v1949 = vld [vmem:[%s1945 + $0x18] sm:$0xff]
    %v1950 = vld [vmem:[%s1945 + $0x20] sm:$0xff]
    %v1951 = vld [vmem:[%s1945 + $0x28] sm:$0xff]
    %v1952 = vld [vmem:[%s1945 + $0x30] sm:$0xff]
    %v1953 = vld [vmem:[%s1945 + $0x38] sm:$0xff]
    %v1954 = vld [vmem:[%s1945 + $0x40] sm:$0xff]
    %v1955 = vld [vmem:[%s1945 + $0x48] sm:$0xff]
    %v1956 = vld [vmem:[%s1945 + $0x50] sm:$0xff]
    %v1957 = vld [vmem:[%s1945 + $0x58] sm:$0xff]
    %v1958 = vld [vmem:[%s1945 + $0x60] sm:$0xff]
    %v1959 = vld [vmem:[%s1945 + $0x68] sm:$0xff]
    %v1960 = vld [vmem:[%s1945 + $0x70] sm:$0xff]
    %1961 = vmatpush.msra.mxu0 0.0
    %1962 = vmatpush.msra.mxu0 %v1960
    %1963 = vmatpush.msra.mxu0 %v1959
    %1964 = vmatpush.msra.mxu0 %v1958
    %1965 = vmatpush.msra.mxu0 %v1957
    %1966 = vmatpush.msra.mxu0 %v1956
    %1967 = vmatpush.msra.mxu0 %v1955
    %1968 = vmatpush.msra.mxu0 %v1954
    %1969 = vmatpush.msra.mxu0 %v1953
    %1970 = vmatpush.msra.mxu0 %v1952
    %1971 = vmatpush.msra.mxu0 %v1951
    %1972 = vmatpush.msra.mxu0 %v1950
    %1973 = vmatpush.msra.mxu0 %v1949
    %1974 = vmatpush.msra.mxu0 %v1948
    %1975 = vmatpush.msra.mxu0 %v1947
    %1976 = vmatpush.msra.mxu0 %v1946
    %1977 = vmatmul.f32.gmra.mxu0 %v1422
    %v1978 = vpop.f32.mrf.mxu0
    %v1979 = vadd.f32 0.0, %v1978
    %1980 = vmatmul.f32.gmra.mxu0 %v1425
    %v1981 = vpop.f32.mrf.mxu0
    %v1982 = vadd.f32 0.0, %v1981
    %1983 = vmatmul.f32.gmra.mxu0 %v1428
    %v1984 = vpop.f32.mrf.mxu0
    %v1985 = vadd.f32 0.0, %v1984
    %1986 = vmatmul.f32.gmra.mxu0 %v1431
    %v1987 = vpop.f32.mrf.mxu0
    %v1988 = vadd.f32 0.0, %v1987
    %1989 = vmatmul.f32.gmra.mxu0 %v1434
    %v1990 = vpop.f32.mrf.mxu0
    %v1991 = vadd.f32 0.0, %v1990
    %1992 = vmatmul.f32.gmra.mxu0 %v1636
    %v1993 = vpop.f32.mrf.mxu0
    %v1994 = vadd.f32 0.0, %v1993
    %1995 = vmatmul.f32.gmra.mxu0 %v1769
    %v1996 = vpop.f32.mrf.mxu0
    %v1997 = vadd.f32 0.0, %v1996
    %1998 = vmatmul.f32.gmra.mxu0 %v1902
    %v1999 = vpop.f32.mrf.mxu0
    %v2000 = vadd.f32 0.0, %v1999
    %2001 = vdwg.mxu0
    %v2002 = vadd.f32 %v1869, %v1922
    %v2003 = vadd.f32 %v1870, %v1925
    %v2004 = vadd.f32 %v1871, %v1928
    %v2005 = vadd.f32 %v1872, %v1931
    %v2006 = vadd.f32 %v1873, %v1934
    %v2007 = vadd.f32 %v1874, %v1937
    %v2008 = vadd.f32 %v1875, %v1940
    %v2009 = vadd.f32 %v1876, %v1943
    %v2010 = vadd.f32 %v1877, %v1979
    %v2011 = vadd.f32 %v1878, %v1982
    %v2012 = vadd.f32 %v1879, %v1985
    %v2013 = vadd.f32 %v1880, %v1988
    %v2014 = vadd.f32 %v1881, %v1991
    %v2015 = vadd.f32 %v1882, %v1994
    %v2016 = vadd.f32 %v1883, %v1997
    %v2017 = vadd.f32 %v1884, %v2000
    %v2018 = vld [vmem:[%s6] sm:$0x1]
    %v2020 = vperm.slane %v2018, 0
    %v2022 = vadd.f32 %v2002, %v2020
    %v2023 = vadd.f32 %v2003, %v2020
    %v2024 = vadd.f32 %v2004, %v2020
    %v2025 = vadd.f32 %v2005, %v2020
    %v2026 = vadd.f32 %v2006, %v2020
    %v2027 = vadd.f32 %v2007, %v2020
    %v2028 = vadd.f32 %v2008, %v2020
    %v2029 = vadd.f32 %v2009, %v2020
    %v2030 = vadd.f32 %v2010, %v2020
    %v2031 = vadd.f32 %v2011, %v2020
    %v2032 = vadd.f32 %v2012, %v2020
    %v2033 = vadd.f32 %v2013, %v2020
    %v2034 = vadd.f32 %v2014, %v2020
    %v2035 = vadd.f32 %v2015, %v2020
    %v2036 = vadd.f32 %v2016, %v2020
    %v2037 = vadd.f32 %v2017, %v2020
    %v2038 = vmax.f32 %v2022, %v2030
    %v2039 = vmax.f32 %v2023, %v2031
    %v2040 = vmax.f32 %v2024, %v2032
    %v2041 = vmax.f32 %v2025, %v2033
    %v2042 = vmax.f32 %v2026, %v2034
    %v2043 = vmax.f32 %v2027, %v2035
    %v2044 = vmax.f32 %v2028, %v2036
    %v2045 = vmax.f32 %v2029, %v2037
    %v2046 = vmax.f32 %v2038, %v2039
    %v2047 = vmax.f32 %v2040, %v2041
    %v2048 = vmax.f32 %v2042, %v2043
    %v2049 = vmax.f32 %v2044, %v2045
    %v2050 = vmax.f32 %v2046, 0.0
    %v2051 = vmax.f32 %v2047, 0.0
    %v2052 = vmax.f32 %v2048, 0.0
    %v2053 = vmax.f32 %v2049, 0.0
    %v2054 = vld [vmem:[%s7] sm:$0xff]
    %v2055 = vld [vmem:[%s7 + $0x8] sm:$0xff]
    %v2056 = vld [vmem:[%s7 + $0x10] sm:$0xff]
    %v2057 = vld [vmem:[%s7 + $0x18] sm:$0xff]
    %v2058 = vld [vmem:[%s7 + $0x20] sm:$0xff]
    %v2059 = vld [vmem:[%s7 + $0x28] sm:$0xff]
    %v2060 = vld [vmem:[%s7 + $0x30] sm:$0xff]
    %v2061 = vld [vmem:[%s7 + $0x38] sm:$0xff]
    %v2062 = vld [vmem:[%s7 + $0x40] sm:$0xff]
    %v2063 = vld [vmem:[%s7 + $0x48] sm:$0xff]
    %s2064 = scalar_lea.vmem %s7, 80
    %v2065 = vld [vmem:[%s2064] sm:$0xff]
    %v2066 = vld [vmem:[%s2064 + $0x8] sm:$0xff]
    %v2067 = vld [vmem:[%s2064 + $0x10] sm:$0xff]
    %v2068 = vld [vmem:[%s2064 + $0x18] sm:$0xff]
    %v2069 = vld [vmem:[%s2064 + $0x20] sm:$0xff]
    %v2070 = vld [vmem:[%s2064 + $0x28] sm:$0xff]
    %v2071 = vld [vmem:[%s2064 + $0x30] sm:$0xff]
    %v2072 = vld [vmem:[%s2064 + $0x38] sm:$0xff]
    %v2073 = vld [vmem:[%s2064 + $0x40] sm:$0xff]
    %v2074 = vld [vmem:[%s2064 + $0x48] sm:$0xff]
    %vm2075 = vcmask 654336
    %v2077 = vsel %vm2075, %v2051, 0
    %2079 = vmatpush.msra.mxu0 0.0
    %2080 = vmatpush.msra.mxu0 0.0
    %2081 = vmatpush.msra.mxu0 0.0
    %2082 = vmatpush.msra.mxu0 0.0
    %2083 = vmatpush.msra.mxu0 0.0
    %2084 = vmatpush.msra.mxu0 0.0
    %2085 = vmatpush.msra.mxu0 %v2074
    %2086 = vmatpush.msra.mxu0 %v2073
    %2087 = vmatpush.msra.mxu0 %v2072
    %2088 = vmatpush.msra.mxu0 %v2071
    %2089 = vmatpush.msra.mxu0 %v2070
    %2090 = vmatpush.msra.mxu0 %v2069
    %2091 = vmatpush.msra.mxu0 %v2068
    %2092 = vmatpush.msra.mxu0 %v2067
    %2093 = vmatpush.msra.mxu0 %v2066
    %2094 = vmatpush.msra.mxu0 %v2065
    %2095 = vmatmul.f32.gmra.mxu0 %v2077
    %v2096 = vpop.f32.mrf.mxu0
    %v2097 = vadd.f32 0.0, %v2096
    %2098 = vdwg.mxu0
    %v2100 = vsel %vm2075, %v2050, 0
    %2102 = vmatpush.msra.mxu0 0.0
    %2103 = vmatpush.msra.mxu0 0.0
    %2104 = vmatpush.msra.mxu0 0.0
    %2105 = vmatpush.msra.mxu0 0.0
    %2106 = vmatpush.msra.mxu0 0.0
    %2107 = vmatpush.msra.mxu0 0.0
    %2108 = vmatpush.msra.mxu0 %v2063
    %2109 = vmatpush.msra.mxu0 %v2062
    %2110 = vmatpush.msra.mxu0 %v2061
    %2111 = vmatpush.msra.mxu0 %v2060
    %2112 = vmatpush.msra.mxu0 %v2059
    %2113 = vmatpush.msra.mxu0 %v2058
    %2114 = vmatpush.msra.mxu0 %v2057
    %2115 = vmatpush.msra.mxu0 %v2056
    %2116 = vmatpush.msra.mxu0 %v2055
    %2117 = vmatpush.msra.mxu0 %v2054
    %2118 = vmatmul.f32.gmra.mxu0 %v2100
    %v2119 = vpop.f32.mrf.mxu0
    %v2120 = vadd.f32 %v2097, %v2119
    %2121 = vdwg.mxu0
    %s2122 = scalar_lea.vmem %s7, 160
    %v2123 = vld [vmem:[%s2122] sm:$0xff]
    %v2124 = vld [vmem:[%s2122 + $0x8] sm:$0xff]
    %v2125 = vld [vmem:[%s2122 + $0x10] sm:$0xff]
    %v2126 = vld [vmem:[%s2122 + $0x18] sm:$0xff]
    %v2127 = vld [vmem:[%s2122 + $0x20] sm:$0xff]
    %v2128 = vld [vmem:[%s2122 + $0x28] sm:$0xff]
    %v2129 = vld [vmem:[%s2122 + $0x30] sm:$0xff]
    %v2130 = vld [vmem:[%s2122 + $0x38] sm:$0xff]
    %v2131 = vld [vmem:[%s2122 + $0x40] sm:$0xff]
    %v2132 = vld [vmem:[%s2122 + $0x48] sm:$0xff]
    %v2134 = vsel %vm2075, %v2052, 0
    %2136 = vmatpush.msra.mxu0 0.0
    %2137 = vmatpush.msra.mxu0 0.0
    %2138 = vmatpush.msra.mxu0 0.0
    %2139 = vmatpush.msra.mxu0 0.0
    %2140 = vmatpush.msra.mxu0 0.0
    %2141 = vmatpush.msra.mxu0 0.0
    %2142 = vmatpush.msra.mxu0 %v2132
    %2143 = vmatpush.msra.mxu0 %v2131
    %2144 = vmatpush.msra.mxu0 %v2130
    %2145 = vmatpush.msra.mxu0 %v2129
    %2146 = vmatpush.msra.mxu0 %v2128
    %2147 = vmatpush.msra.mxu0 %v2127
    %2148 = vmatpush.msra.mxu0 %v2126
    %2149 = vmatpush.msra.mxu0 %v2125
    %2150 = vmatpush.msra.mxu0 %v2124
    %2151 = vmatpush.msra.mxu0 %v2123
    %2152 = vmatmul.f32.gmra.mxu0 %v2134
    %v2153 = vpop.f32.mrf.mxu0
    %v2154 = vadd.f32 0.0, %v2153
    %2155 = vdwg.mxu0
    %v2156 = vadd.f32 %v2120, %v2154
    %s2157 = scalar_lea.vmem %s7, 240
    %v2158 = vld [vmem:[%s2157] sm:$0xff]
    %v2159 = vld [vmem:[%s2157 + $0x8] sm:$0xff]
    %v2160 = vld [vmem:[%s2157 + $0x10] sm:$0xff]
    %v2161 = vld [vmem:[%s2157 + $0x18] sm:$0xff]
    %v2162 = vld [vmem:[%s2157 + $0x20] sm:$0xff]
    %v2163 = vld [vmem:[%s2157 + $0x28] sm:$0xff]
    %v2164 = vld [vmem:[%s2157 + $0x30] sm:$0xff]
    %v2165 = vld [vmem:[%s2157 + $0x38] sm:$0xff]
    %v2166 = vld [vmem:[%s2157 + $0x40] sm:$0xff]
    %v2167 = vld [vmem:[%s2157 + $0x48] sm:$0xff]
    %v2169 = vsel %vm2075, %v2053, 0
    %2171 = vmatpush.msra.mxu0 0.0
    %2172 = vmatpush.msra.mxu0 0.0
    %2173 = vmatpush.msra.mxu0 0.0
    %2174 = vmatpush.msra.mxu0 0.0
    %2175 = vmatpush.msra.mxu0 0.0
    %2176 = vmatpush.msra.mxu0 0.0
    %2177 = vmatpush.msra.mxu0 %v2167
    %2178 = vmatpush.msra.mxu0 %v2166
    %2179 = vmatpush.msra.mxu0 %v2165
    %2180 = vmatpush.msra.mxu0 %v2164
    %2181 = vmatpush.msra.mxu0 %v2163
    %2182 = vmatpush.msra.mxu0 %v2162
    %2183 = vmatpush.msra.mxu0 %v2161
    %2184 = vmatpush.msra.mxu0 %v2160
    %2185 = vmatpush.msra.mxu0 %v2159
    %2186 = vmatpush.msra.mxu0 %v2158
    %2187 = vmatmul.f32.gmra.mxu0 %v2169
    %v2188 = vpop.f32.mrf.mxu0
    %v2189 = vadd.f32 0.0, %v2188
    %2190 = vdwg.mxu0
    %v2191 = vadd.f32 %v2156, %v2189
    %v2192 = vld [vmem:[%s8] sm:$0x1]
    %v2194 = vperm.slane %v2192, 0
    %v2196 = vadd.f32 %v2191, %v2194
    %v2197 = vmax.f32 %v2196, 0.0
    %v2198 = vld [vmem:[%s9] sm:$0xff]
    %v2199 = vld [vmem:[%s9 + $0x8] sm:$0xff]
    %v2200 = vld [vmem:[%s9 + $0x10] sm:$0xff]
    %v2201 = vld [vmem:[%s9 + $0x18] sm:$0xff]
    %v2202 = vld [vmem:[%s9 + $0x20] sm:$0xff]
    %v2203 = vld [vmem:[%s9 + $0x28] sm:$0xff]
    %v2204 = vld [vmem:[%s9 + $0x30] sm:$0x3]
    %v2205 = vld [vmem:[%s10] sm:$0x1]
    %v2207 = vperm.slane %v2205, 0
    %vm2209 = vcmask 408576
    %v2211 = vsel %vm2209, %v2197, 0
    %vm2213 = vcmask 1041408
    %v2215 = vsel %vm2213, %v2204, 0
    %2217 = vmatpush.msra.mxu0 0.0
    %2218 = vmatpush.msra.mxu0 0.0
    %2219 = vmatpush.msra.mxu0 0.0
    %2220 = vmatpush.msra.mxu0 0.0
    %2221 = vmatpush.msra.mxu0 0.0
    %2222 = vmatpush.msra.mxu0 0.0
    %2223 = vmatpush.msra.mxu0 0.0
    %2224 = vmatpush.msra.mxu0 0.0
    %2225 = vmatpush.msra.mxu0 0.0
    %2226 = vmatpush.msra.mxu0 %v2215
    %2227 = vmatpush.msra.mxu0 %v2203
    %2228 = vmatpush.msra.mxu0 %v2202
    %2229 = vmatpush.msra.mxu0 %v2201
    %2230 = vmatpush.msra.mxu0 %v2200
    %2231 = vmatpush.msra.mxu0 %v2199
    %2232 = vmatpush.msra.mxu0 %v2198
    %2233 = vmatmul.f32.gmra.mxu0 %v2211
    %v2234 = vpop.f32.mrf.mxu0
    %v2235 = vadd.f32 %v2207, %v2234
    %2236 = vdwg.mxu0
    %vm2237 = vcmask 80896
    %v2238 = vsel %vm2237, %v2235, -inf
    %2239 = vmax.xlane.f32.xlu0 %v2238
    %v2240 = vpop.xlane.xlu0 %2239
    %v2241 = vsub.f32 %v2235, %v2240
    %v2242 = vmul.f32 %v2241, 1.442695
    %v2243 = vpow.pop %v2242
    %v2244 = vsel %vm2237, %v2243, 0.0
    %2245 = vadd.xlane.f32.xlu0 %v2244
    %v2246 = vpop.xlane.xlu0 %2245
    %v2247 = vlog2.pop %v2246
    %v2248 = vmul.f32 %v2247, 0.6931472
    %v2249 = vadd.f32 %v2248, %v2240
    %v2250 = vsub.f32 %v2235, %v2249
    %2251 = vst.msk [vmem:[#allocation2] sm:$0xff] %vm2237, %v2250
    // Predicated region
    $region46: #{tpu_custom_call.1} parent=1 // pred_check
      _
    $region47: #{tpu_custom_call.1} parent=1 // pred_check_branch
      %2253 = sbr.rel (0) target = $region49
    $region48: #{tpu_custom_call.1} parent=1 // pred_region
      %2255 = vsyncadd [#allocation3], 0
      %s2257 = sshll.u32 [#allocation2], 4
      %s2258 = int_to_ptr.vmem [resolvable:$true] %s2257
      %s2259 = sshll.u32 %s11, 4
      %s2260 = int_to_ptr.hbm [resolvable:$true] %s2259
      %2262 = dma.vmem_to_hbm [thread:$0]  %s2258, 128, %s2260, [#allocation3]
    $region49: #{tpu_custom_call.1} parent=1 // pred_fallthru
      _
    // Predicated region
    $region50: #{tpu_custom_call.1} parent=1 // pred_check
      _
    $region51: #{tpu_custom_call.1} parent=1 // pred_check_branch
      %2264 = sbr.rel (0) target = $region53
    $region52: #{tpu_custom_call.1} parent=1 // pred_region
      %2266 = dma.done [#allocation3], 128
    $region53: #{tpu_custom_call.1} parent=1 // pred_fallthru
      _
    %2267 = vsyncpa [#allocation3], 1

</llo_original>
